<compile_context>
chip_gen: v5e
topology: v5e:2x2
jax: 0.10.0
libtpu: 0.0.40
codegen_flags: <defaults>
</compile_context>

<pallas_src>
import functools

import jax
import jax.numpy as jnp
import numpy as np
from jax.experimental import pallas as pl
from jax.experimental.pallas import tpu as pltpu

LANE = 128
SUBLANE = 8


# ----------------------------- Pallas kernel ------------------------------- #

def gcn_fused_kernel(a_ref, x_ref, w1_ref, b1_ref, w2_ref, b2_ref,
                     p_ref, wlin_ref, blin_ref, o_ref, *, layers, fp, hp):
    """Whole GCN forward for one block-diagonal mega-batch of graphs.

    a_ref    (NTp, NTp)   bf16  dense block-diagonal adjacency (dst x src)
    x_ref    (NTp, Fp)    bf16  node features, feature dim padded to 128
    w1_ref   (2*Fp, Hp)   bf16  [W_rel1; W_root1] stacked along K
    b1_ref   (1, Hp)      f32
    w2_ref   (2*Hp, Hp)   bf16  [W_rel2; W_root2] stacked along K
    b2_ref   (1, Hp)      f32
    p_ref    (GTp, NTp)   bf16  row-normalized mean-pool matrix
    wlin_ref (Hp, Cp)     bf16
    blin_ref (1, Cp)      f32
    o_ref    (GTp, Cp)    f32
    """
    a = a_ref[...]
    x = x_ref[...]

    # conv1 + relu: two MXU dots against static slices of the stacked weight
    # (no lane-axis concat, no materialized (N, 2K) buffer).
    agg = jnp.dot(a, x, preferred_element_type=jnp.float32)
    h = (jnp.dot(agg.astype(jnp.bfloat16), w1_ref[pl.ds(0, fp), :],
                 preferred_element_type=jnp.float32)
         + jnp.dot(x, w1_ref[pl.ds(fp, fp), :],
                   preferred_element_type=jnp.float32)
         + b1_ref[...])
    h = jnp.maximum(h, 0.0)

    # `layers` residual blocks sharing conv2's weights (loaded once; they stay
    # VMEM-resident across grid steps via the constant index_map).
    w2_rel = w2_ref[pl.ds(0, hp), :]
    w2_root = w2_ref[pl.ds(hp, hp), :]
    b2 = jnp.broadcast_to(b2_ref[...], h.shape)   # hoisted out of the loop

    def body(_, h_cur):
        hb = h_cur.astype(jnp.bfloat16)
        agg_l = jnp.dot(a, hb, preferred_element_type=jnp.float32)
        out = (jnp.dot(agg_l.astype(jnp.bfloat16), w2_rel,
                       preferred_element_type=jnp.float32)
               + jnp.dot(hb, w2_root, preferred_element_type=jnp.float32)
               + b2)
        return jnp.maximum(out, 0.0) + h_cur

    h = jax.lax.fori_loop(0, layers, body, h, unroll=True)

    # global_mean_pool + final Linear.
    # TODO(synk): dropout omitted -- inference path (training=False) is identity.
    pooled = jnp.dot(p_ref[...], h.astype(jnp.bfloat16),
                     preferred_element_type=jnp.float32)
    o_ref[...] = (jnp.dot(pooled.astype(jnp.bfloat16), wlin_ref[...],
                          preferred_element_type=jnp.float32) + blin_ref[...])


# ------------------------------- wrappers ---------------------------------- #

def _round_up(v, m):
    return ((v + m - 1) // m) * m


def _pad_to(arr, shape):
    return jnp.pad(arr, [(0, s - d) for d, s in zip(arr.shape, shape)])


def prepack_params(params):
    """One-time weight packing: pad to lane-dense tiles, stack W_rel/W_root,
    cast MXU operands to bf16. Done once, outside the per-call jit."""
    f, hdim = params["conv1"]["w_rel"].shape
    c = params["lin"]["w"].shape[1]
    fp, hp, cp = _round_up(f, LANE), _round_up(hdim, LANE), _round_up(c, LANE)

    w1 = jnp.concatenate(
        [_pad_to(params["conv1"]["w_rel"], (fp, hp)),
         _pad_to(params["conv1"]["w_root"], (fp, hp))], axis=0
    ).astype(jnp.bfloat16)
    b1 = _pad_to(params["conv1"]["b_rel"], (1, hp)).astype(jnp.float32)
    w2 = jnp.concatenate(
        [_pad_to(params["conv2"]["w_rel"], (hp, hp)),
         _pad_to(params["conv2"]["w_root"], (hp, hp))], axis=0
    ).astype(jnp.bfloat16)
    b2 = _pad_to(params["conv2"]["b_rel"], (1, hp)).astype(jnp.float32)
    wl = _pad_to(params["lin"]["w"], (hp, cp)).astype(jnp.bfloat16)
    bl = _pad_to(params["lin"]["b"], (1, cp)).astype(jnp.float32)

    packed = (w1, b1, w2, b2, wl, bl)
    dims = (fp, hp, cp, c)           # static python ints
    return packed, dims


@functools.partial(jax.jit, static_argnames=("layers", "dims"))
def gcn_forward_batched(packed, a, x, pool_mat, layers, dims):
    """a: (NB, NT, NT), x: (NB, NT, F), pool_mat: (NB, GT, NT), all f32.
    Returns (NB, GT, C) logits."""
    w1, b1, w2, b2, wl, bl = packed
    fp, hp, cp, c = dims
    nb, nt, _ = a.shape
    gt = pool_mat.shape[1]
    ntp = _round_up(nt, LANE)
    gtp = _round_up(gt, SUBLANE)

    # Per-call data padding / bf16 casts only (weights already prepacked).
    a_b = _pad_to(a, (nb, ntp, ntp)).astype(jnp.bfloat16)     # 0/1/counts exact
    x_b = _pad_to(x, (nb, ntp, fp)).astype(jnp.bfloat16)
    p_b = _pad_to(pool_mat, (nb, gtp, ntp)).astype(jnp.bfloat16)  # 1/8 exact

    def const_spec(shape):
        return pl.BlockSpec(shape, lambda b: (0, 0))

    def batched_spec(shape):
        return pl.BlockSpec((None,) + shape, lambda b: (b, 0, 0))

    out_p = pl.pallas_call(
        functools.partial(gcn_fused_kernel, layers=layers, fp=fp, hp=hp),
        out_shape=jax.ShapeDtypeStruct((nb, gtp, cp), jnp.float32),
        grid=(nb,),
        in_specs=[batched_spec((ntp, ntp)),      # A   (per mega-batch)
                  batched_spec((ntp, fp)),       # X   (per mega-batch)
                  const_spec(w1.shape), const_spec(b1.shape),
                  const_spec(w2.shape), const_spec(b2.shape),
                  batched_spec((gtp, ntp)),      # pool (per mega-batch)
                  const_spec(wl.shape), const_spec(bl.shape)],
        out_specs=batched_spec((gtp, cp)),
        compiler_params=pltpu.CompilerParams(
            dimension_semantics=("parallel",)),   # shards across v7x's 2 TCs
    )(a_b, x_b, w1, b1, w2, b2, p_b, wl, bl)
    return out_p[:, :gt, :c]


# ------------------------- pure-JAX reference checks ------------------------ #

def gcn_reference_f32(params, a, x, pool_mat, layers):
    """Exact PyTorch-module semantics in f32 (loose sanity check)."""
    hi = jax.lax.Precision.HIGHEST

    def one(a_i, x_i, p_i):
        def conv(p, xx):
            return (jnp.dot(jnp.dot(a_i, xx, precision=hi), p["w_rel"],
                            precision=hi)
                    + jnp.dot(xx, p["w_root"], precision=hi) + p["b_rel"])
        h = jnp.maximum(conv(params["conv1"], x_i), 0.0)
        for _ in range(layers):
            prev = h
            h = jnp.maximum(conv(params["conv2"], h), 0.0) + prev
        return (jnp.dot(jnp.dot(p_i, h, precision=hi), params["lin"]["w"],
                        precision=hi) + params["lin"]["b"])

    return jax.vmap(one)(a, x, pool_mat)


def gcn_reference_bf16(params, a, x, pool_mat, layers):
    """Reference with the SAME bf16 rounding points as the kernel (tight check)."""
    hi = jax.lax.Precision.HIGHEST
    bf = lambda v: v.astype(jnp.bfloat16).astype(jnp.float32)

    def one(a_i, x_i, p_i):
        a_ = bf(a_i)

        def conv(p, xx):
            xb = bf(xx)
            agg = bf(jnp.dot(a_, xb, precision=hi))
            return (jnp.dot(agg, bf(p["w_rel"]), precision=hi)
                    + jnp.dot(xb, bf(p["w_root"]), precision=hi) + p["b_rel"])

        h = jnp.maximum(conv(params["conv1"], x_i), 0.0)
        for _ in range(layers):
            prev = h
            h = jnp.maximum(conv(params["conv2"], h), 0.0) + prev
        pooled = bf(jnp.dot(bf(p_i), bf(h), precision=hi))
        return (jnp.dot(pooled, bf(params["lin"]["w"]), precision=hi)
                + params["lin"]["b"])

    return jax.vmap(one)(a, x, pool_mat)


# ---------------------------------- main ------------------------------------ #

if __name__ == "__main__":
    num_node_features = 16
    hidden_channels = 32
    num_classes = 6
    layers = 2

    graphs_per_batch = 16          # graphs packed block-diagonally per grid step
    nodes_per_graph = 8
    edges_per_graph = 24
    num_batches = 4                # grid size (parallel axis)
    nt = graphs_per_batch * nodes_per_graph   # 128 nodes per mega-batch

    key = jax.random.PRNGKey(0)
    keys = jax.random.split(key, 12)

    def linear_w(k, fan_in, fan_out):
        bound = 1.0 / np.sqrt(fan_in)
        return jax.random.uniform(k, (fan_in, fan_out), jnp.float32,
                                  -bound, bound)

    def linear_b(k, fan_in, fan_out):
        bound = 1.0 / np.sqrt(fan_in)
        return jax.random.uniform(k, (1, fan_out), jnp.float32, -bound, bound)

    params = {
        "conv1": {
            "w_rel": linear_w(keys[0], num_node_features, hidden_channels),
            "w_root": linear_w(keys[1], num_node_features, hidden_channels),
            "b_rel": linear_b(keys[2], num_node_features, hidden_channels),
        },
        "conv2": {
            "w_rel": linear_w(keys[3], hidden_channels, hidden_channels),
            "w_root": linear_w(keys[4], hidden_channels, hidden_channels),
            "b_rel": linear_b(keys[5], hidden_channels, hidden_channels),
        },
        # conv3 exists in the PyTorch __init__ but is never used in forward.
        "lin": {
            "w": linear_w(keys[6], hidden_channels, num_classes),
            "b": linear_b(keys[7], hidden_channels, num_classes),
        },
    }

    # Random small graphs, packed block-diagonally: within mega-batch b,
    # graph g owns nodes [g*npg, (g+1)*npg). Duplicate edges ADD with
    # multiplicity, matching PyG GraphConv aggr='add' scatter-add semantics.
    e_shape = (num_batches, graphs_per_batch, edges_per_graph)
    src = jax.random.randint(keys[8], e_shape, 0, nodes_per_graph)
    dst = jax.random.randint(keys[9], e_shape, 0, nodes_per_graph)
    offset = (jnp.arange(graphs_per_batch) * nodes_per_graph)[None, :, None]
    src_n = (src + offset).reshape(num_batches, -1)
    dst_n = (dst + offset).reshape(num_batches, -1)
    b_idx = jnp.broadcast_to(jnp.arange(num_batches)[:, None], src_n.shape)
    a = jnp.zeros((num_batches, nt, nt), jnp.float32).at[
        b_idx.ravel(), dst_n.ravel(), src_n.ravel()].add(1.0)

    # Node features.
    x = jax.random.normal(keys[10], (num_batches, nt, num_node_features),
                          jnp.float32)

    # global_mean_pool as a (G, N) row-normalized membership matrix per batch.
    node_graph = jnp.repeat(jnp.arange(graphs_per_batch), nodes_per_graph)
    one_hot = (node_graph[None, :] ==
               jnp.arange(graphs_per_batch)[:, None]).astype(jnp.float32)
    pool_single = one_hot / one_hot.sum(axis=1, keepdims=True)
    pool_mat = jnp.tile(pool_single[None], (num_batches, 1, 1))

    # One-time weight prepack (outside the per-call jit), then the fused call.
    packed, dims = prepack_params(params)
    out = jax.block_until_ready(
        gcn_forward_batched(packed, a, x, pool_mat, layers, dims))

    # Tight check: reference with identical bf16 rounding points.
    ref_bf16 = gcn_reference_bf16(params, a, x, pool_mat, layers)
    np.testing.assert_allclose(np.asarray(out), np.asarray(ref_bf16),
                               rtol=2e-3, atol=2e-3)

    # Loose semantic check against the full-f32 module reference.
    ref_f32 = gcn_reference_f32(params, a, x, pool_mat, layers)
    np.testing.assert_allclose(np.asarray(out), np.asarray(ref_f32),
                               rtol=1e-1, atol=1e-1)

    print("KERNEL_OK")
</pallas_src>

<mosaic_0001>
module attributes {stable_mosaic.version = 11 : i64} {
  func.func @gcn_fused_kernel(%arg0: i32, %arg1: memref<1x128x128xbf16, #tpu.memory_space<vmem>>, %arg2: memref<1x128x128xbf16, #tpu.memory_space<vmem>>, %arg3: memref<256x128xbf16, #tpu.memory_space<vmem>>, %arg4: memref<1x128xf32, #tpu.memory_space<vmem>>, %arg5: memref<256x128xbf16, #tpu.memory_space<vmem>>, %arg6: memref<1x128xf32, #tpu.memory_space<vmem>>, %arg7: memref<1x16x128xbf16, #tpu.memory_space<vmem>>, %arg8: memref<128x128xbf16, #tpu.memory_space<vmem>>, %arg9: memref<1x128xf32, #tpu.memory_space<vmem>>, %arg10: memref<1x16x128xf32, #tpu.memory_space<vmem>>) attributes {dimension_semantics = [#tpu.dimension_semantics<parallel>], iteration_bounds = array<i64: 4>, scalar_prefetch = 0 : i64, scratch_operands = 0 : i64, tpu.core_type = #tpu.core_type<tc>, window_params = [{transform_indices = @transform_0, window_bounds = array<i64: 1, 128, 128>}, {transform_indices = @transform_1, window_bounds = array<i64: 1, 128, 128>}, {pipeline_mode = #tpu.pipeline_mode<synchronous>, transform_indices = @transform_2, window_bounds = array<i64: 256, 128>}, {pipeline_mode = #tpu.pipeline_mode<synchronous>, transform_indices = @transform_3, window_bounds = array<i64: 1, 128>}, {pipeline_mode = #tpu.pipeline_mode<synchronous>, transform_indices = @transform_4, window_bounds = array<i64: 256, 128>}, {pipeline_mode = #tpu.pipeline_mode<synchronous>, transform_indices = @transform_5, window_bounds = array<i64: 1, 128>}, {transform_indices = @transform_6, window_bounds = array<i64: 1, 16, 128>}, {pipeline_mode = #tpu.pipeline_mode<synchronous>, transform_indices = @transform_7, window_bounds = array<i64: 128, 128>}, {pipeline_mode = #tpu.pipeline_mode<synchronous>, transform_indices = @transform_8, window_bounds = array<i64: 1, 128>}, {transform_indices = @transform_9, window_bounds = array<i64: 1, 16, 128>}]} {
    %c0 = arith.constant 0 : index
    %c0_0 = arith.constant 0 : index
    %c0_1 = arith.constant 0 : index
    %0 = vector.load %arg1[%c0, %c0_0, %c0_1] : memref<1x128x128xbf16, #tpu.memory_space<vmem>>, vector<1x128x128xbf16>
    %1 = vector.shape_cast %0 : vector<1x128x128xbf16> to vector<128x128xbf16>
    %c0_2 = arith.constant 0 : index
    %c0_3 = arith.constant 0 : index
    %c0_4 = arith.constant 0 : index
    %2 = vector.load %arg2[%c0_2, %c0_3, %c0_4] : memref<1x128x128xbf16, #tpu.memory_space<vmem>>, vector<1x128x128xbf16>
    %3 = vector.shape_cast %2 : vector<1x128x128xbf16> to vector<128x128xbf16>
    %cst = arith.constant dense<0.000000e+00> : vector<128x128xf32>
    %4 = tpu.matmul %1, %3, %cst {dimension_numbers = #tpu.dot_dimension_numbers<[1], [0], [0], [1], [0, 0, 1, 1], [], []>} : vector<128x128xbf16>, vector<128x128xbf16>, vector<128x128xf32> -> vector<128x128xf32>
    %5 = arith.truncf %4 : vector<128x128xf32> to vector<128x128xbf16>
    %c0_5 = arith.constant 0 : index
    %c0_6 = arith.constant 0 : index
    %6 = vector.load %arg3[%c0_5, %c0_6] : memref<256x128xbf16, #tpu.memory_space<vmem>>, vector<128x128xbf16>
    %cst_7 = arith.constant dense<0.000000e+00> : vector<128x128xf32>
    %7 = tpu.matmul %5, %6, %cst_7 {dimension_numbers = #tpu.dot_dimension_numbers<[1], [0], [0], [1], [0, 0, 1, 1], [], []>} : vector<128x128xbf16>, vector<128x128xbf16>, vector<128x128xf32> -> vector<128x128xf32>
    %c128 = arith.constant 128 : index
    %c0_8 = arith.constant 0 : index
    %8 = vector.load %arg3[%c128, %c0_8] : memref<256x128xbf16, #tpu.memory_space<vmem>>, vector<128x128xbf16>
    %cst_9 = arith.constant dense<0.000000e+00> : vector<128x128xf32>
    %9 = tpu.matmul %3, %8, %cst_9 {dimension_numbers = #tpu.dot_dimension_numbers<[1], [0], [0], [1], [0, 0, 1, 1], [], []>} : vector<128x128xbf16>, vector<128x128xbf16>, vector<128x128xf32> -> vector<128x128xf32>
    %10 = arith.addf %7, %9 : vector<128x128xf32>
    %c0_10 = arith.constant 0 : index
    %c0_11 = arith.constant 0 : index
    %11 = vector.load %arg4[%c0_10, %c0_11] : memref<1x128xf32, #tpu.memory_space<vmem>>, vector<1x128xf32>
    %12 = vector.broadcast %11 : vector<1x128xf32> to vector<128x128xf32>
    %13 = arith.addf %10, %12 : vector<128x128xf32>
    %cst_12 = arith.constant 0.000000e+00 : f32
    %14 = vector.broadcast %cst_12 : f32 to vector<128x128xf32>
    %15 = arith.maximumf %13, %14 : vector<128x128xf32>
    %c0_13 = arith.constant 0 : index
    %c0_14 = arith.constant 0 : index
    %16 = vector.load %arg5[%c0_13, %c0_14] : memref<256x128xbf16, #tpu.memory_space<vmem>>, vector<128x128xbf16>
    %c128_15 = arith.constant 128 : index
    %c0_16 = arith.constant 0 : index
    %17 = vector.load %arg5[%c128_15, %c0_16] : memref<256x128xbf16, #tpu.memory_space<vmem>>, vector<128x128xbf16>
    %c0_17 = arith.constant 0 : index
    %c0_18 = arith.constant 0 : index
    %18 = vector.load %arg6[%c0_17, %c0_18] : memref<1x128xf32, #tpu.memory_space<vmem>>, vector<1x128xf32>
    %19 = vector.shape_cast %18 : vector<1x128xf32> to vector<1x128xf32>
    %20 = vector.broadcast %19 : vector<1x128xf32> to vector<128x128xf32>
    %c0_i32 = arith.constant 0 : i32
    %21 = arith.truncf %15 : vector<128x128xf32> to vector<128x128xbf16>
    %cst_19 = arith.constant dense<0.000000e+00> : vector<128x128xf32>
    %22 = tpu.matmul %1, %21, %cst_19 {dimension_numbers = #tpu.dot_dimension_numbers<[1], [0], [0], [1], [0, 0, 1, 1], [], []>} : vector<128x128xbf16>, vector<128x128xbf16>, vector<128x128xf32> -> vector<128x128xf32>
    %23 = arith.truncf %22 : vector<128x128xf32> to vector<128x128xbf16>
    %cst_20 = arith.constant dense<0.000000e+00> : vector<128x128xf32>
    %24 = tpu.matmul %23, %16, %cst_20 {dimension_numbers = #tpu.dot_dimension_numbers<[1], [0], [0], [1], [0, 0, 1, 1], [], []>} : vector<128x128xbf16>, vector<128x128xbf16>, vector<128x128xf32> -> vector<128x128xf32>
    %cst_21 = arith.constant dense<0.000000e+00> : vector<128x128xf32>
    %25 = tpu.matmul %21, %17, %cst_21 {dimension_numbers = #tpu.dot_dimension_numbers<[1], [0], [0], [1], [0, 0, 1, 1], [], []>} : vector<128x128xbf16>, vector<128x128xbf16>, vector<128x128xf32> -> vector<128x128xf32>
    %26 = arith.addf %24, %25 : vector<128x128xf32>
    %27 = arith.addf %26, %20 : vector<128x128xf32>
    %cst_22 = arith.constant 0.000000e+00 : f32
    %28 = vector.broadcast %cst_22 : f32 to vector<128x128xf32>
    %29 = arith.maximumf %27, %28 : vector<128x128xf32>
    %30 = arith.addf %29, %15 : vector<128x128xf32>
    %c1_i32 = arith.constant 1 : i32
    %31 = arith.truncf %30 : vector<128x128xf32> to vector<128x128xbf16>
    %cst_23 = arith.constant dense<0.000000e+00> : vector<128x128xf32>
    %32 = tpu.matmul %1, %31, %cst_23 {dimension_numbers = #tpu.dot_dimension_numbers<[1], [0], [0], [1], [0, 0, 1, 1], [], []>} : vector<128x128xbf16>, vector<128x128xbf16>, vector<128x128xf32> -> vector<128x128xf32>
    %33 = arith.truncf %32 : vector<128x128xf32> to vector<128x128xbf16>
    %cst_24 = arith.constant dense<0.000000e+00> : vector<128x128xf32>
    %34 = tpu.matmul %33, %16, %cst_24 {dimension_numbers = #tpu.dot_dimension_numbers<[1], [0], [0], [1], [0, 0, 1, 1], [], []>} : vector<128x128xbf16>, vector<128x128xbf16>, vector<128x128xf32> -> vector<128x128xf32>
    %cst_25 = arith.constant dense<0.000000e+00> : vector<128x128xf32>
    %35 = tpu.matmul %31, %17, %cst_25 {dimension_numbers = #tpu.dot_dimension_numbers<[1], [0], [0], [1], [0, 0, 1, 1], [], []>} : vector<128x128xbf16>, vector<128x128xbf16>, vector<128x128xf32> -> vector<128x128xf32>
    %36 = arith.addf %34, %35 : vector<128x128xf32>
    %37 = arith.addf %36, %20 : vector<128x128xf32>
    %cst_26 = arith.constant 0.000000e+00 : f32
    %38 = vector.broadcast %cst_26 : f32 to vector<128x128xf32>
    %39 = arith.maximumf %37, %38 : vector<128x128xf32>
    %40 = arith.addf %39, %30 : vector<128x128xf32>
    %c0_27 = arith.constant 0 : index
    %c0_28 = arith.constant 0 : index
    %c0_29 = arith.constant 0 : index
    %41 = vector.load %arg7[%c0_27, %c0_28, %c0_29] : memref<1x16x128xbf16, #tpu.memory_space<vmem>>, vector<1x16x128xbf16>
    %42 = vector.shape_cast %41 : vector<1x16x128xbf16> to vector<16x128xbf16>
    %43 = arith.truncf %40 : vector<128x128xf32> to vector<128x128xbf16>
    %cst_30 = arith.constant dense<0.000000e+00> : vector<16x128xf32>
    %44 = tpu.matmul %42, %43, %cst_30 {dimension_numbers = #tpu.dot_dimension_numbers<[1], [0], [0], [1], [0, 0, 1, 1], [], []>} : vector<16x128xbf16>, vector<128x128xbf16>, vector<16x128xf32> -> vector<16x128xf32>
    %45 = arith.truncf %44 : vector<16x128xf32> to vector<16x128xbf16>
    %c0_31 = arith.constant 0 : index
    %c0_32 = arith.constant 0 : index
    %46 = vector.load %arg8[%c0_31, %c0_32] : memref<128x128xbf16, #tpu.memory_space<vmem>>, vector<128x128xbf16>
    %cst_33 = arith.constant dense<0.000000e+00> : vector<16x128xf32>
    %47 = tpu.matmul %45, %46, %cst_33 {dimension_numbers = #tpu.dot_dimension_numbers<[1], [0], [0], [1], [0, 0, 1, 1], [], []>} : vector<16x128xbf16>, vector<128x128xbf16>, vector<16x128xf32> -> vector<16x128xf32>
    %c0_34 = arith.constant 0 : index
    %c0_35 = arith.constant 0 : index
    %48 = vector.load %arg9[%c0_34, %c0_35] : memref<1x128xf32, #tpu.memory_space<vmem>>, vector<1x128xf32>
    %49 = vector.broadcast %48 : vector<1x128xf32> to vector<16x128xf32>
    %50 = arith.addf %47, %49 : vector<16x128xf32>
    %c0_36 = arith.constant 0 : index
    %c0_37 = arith.constant 0 : index
    %c0_38 = arith.constant 0 : index
    %51 = vector.load %arg10[%c0_36, %c0_37, %c0_38] : memref<1x16x128xf32, #tpu.memory_space<vmem>>, vector<1x16x128xf32>
    %52 = vector.shape_cast %51 : vector<1x16x128xf32> to vector<16x128xf32>
    %53 = vector.shape_cast %50 : vector<16x128xf32> to vector<1x16x128xf32>
    tpu.vector_store %arg10[%c0_36, %c0_37, %c0_38], %53 {strides = array<i32>} : memref<1x16x128xf32, #tpu.memory_space<vmem>>, vector<1x16x128xf32>,
    return
  }
  func.func @transform_0(%arg0: i32) -> (i32, i32, i32) {
    %c0_i32 = arith.constant 0 : i32
    %c0_i32_0 = arith.constant 0 : i32
    %c0_i32_1 = arith.constant 0 : i32
    return %arg0, %c0_i32, %c0_i32_0 : i32, i32, i32
  }
  func.func @transform_1(%arg0: i32) -> (i32, i32, i32) {
    %c0_i32 = arith.constant 0 : i32
    %c0_i32_0 = arith.constant 0 : i32
    %c0_i32_1 = arith.constant 0 : i32
    return %arg0, %c0_i32, %c0_i32_0 : i32, i32, i32
  }
  func.func @transform_2(%arg0: i32) -> (i32, i32) {
    %c0_i32 = arith.constant 0 : i32
    %c0_i32_0 = arith.constant 0 : i32
    %c0_i32_1 = arith.constant 0 : i32
    return %c0_i32, %c0_i32_0 : i32, i32
  }
  func.func @transform_3(%arg0: i32) -> (i32, i32) {
    %c0_i32 = arith.constant 0 : i32
    %c0_i32_0 = arith.constant 0 : i32
    %c0_i32_1 = arith.constant 0 : i32
    return %c0_i32, %c0_i32_0 : i32, i32
  }
  func.func @transform_4(%arg0: i32) -> (i32, i32) {
    %c0_i32 = arith.constant 0 : i32
    %c0_i32_0 = arith.constant 0 : i32
    %c0_i32_1 = arith.constant 0 : i32
    return %c0_i32, %c0_i32_0 : i32, i32
  }
  func.func @transform_5(%arg0: i32) -> (i32, i32) {
    %c0_i32 = arith.constant 0 : i32
    %c0_i32_0 = arith.constant 0 : i32
    %c0_i32_1 = arith.constant 0 : i32
    return %c0_i32, %c0_i32_0 : i32, i32
  }
  func.func @transform_6(%arg0: i32) -> (i32, i32, i32) {
    %c0_i32 = arith.constant 0 : i32
    %c0_i32_0 = arith.constant 0 : i32
    %c0_i32_1 = arith.constant 0 : i32
    return %arg0, %c0_i32, %c0_i32_0 : i32, i32, i32
  }
  func.func @transform_7(%arg0: i32) -> (i32, i32) {
    %c0_i32 = arith.constant 0 : i32
    %c0_i32_0 = arith.constant 0 : i32
    %c0_i32_1 = arith.constant 0 : i32
    return %c0_i32, %c0_i32_0 : i32, i32
  }
  func.func @transform_8(%arg0: i32) -> (i32, i32) {
    %c0_i32 = arith.constant 0 : i32
    %c0_i32_0 = arith.constant 0 : i32
    %c0_i32_1 = arith.constant 0 : i32
    return %c0_i32, %c0_i32_0 : i32, i32
  }
  func.func @transform_9(%arg0: i32) -> (i32, i32, i32) {
    %c0_i32 = arith.constant 0 : i32
    %c0_i32_0 = arith.constant 0 : i32
    %c0_i32_1 = arith.constant 0 : i32
    return %arg0, %c0_i32, %c0_i32_0 : i32, i32, i32
  }
}

</mosaic_0001>

<llo_original>
// kernel: gcn_forward_batched.1
$region0: #{gcn_forward_batched.1}
  #allocation0 [shape = 'u32[]', space=smem, size = 0x4, offset = 0x4, fixed_abs, tag = 'smem constant byte address 0x4 - core index']
  #allocation1 [shape = 'u32[72,128]{1,0:T(1,128)}', space=vmem, size = 0x9000, scoped, tag = 'internal scratch']
  %s0 = inlined_call_operand.vmem [shape: bf16[4,128,128], index: 0, kind: input, shape index: {}]
  %s1 = inlined_call_operand.vmem [shape: bf16[4,128,128], index: 1, kind: input, shape index: {}]
  %s2 = inlined_call_operand.vmem [shape: bf16[256,128], index: 2, kind: input, shape index: {}]
  %s3 = inlined_call_operand.vmem [shape: f32[1,128], index: 3, kind: input, shape index: {}]
  %s4 = inlined_call_operand.vmem [shape: bf16[256,128], index: 4, kind: input, shape index: {}]
  %s5 = inlined_call_operand.vmem [shape: f32[1,128], index: 5, kind: input, shape index: {}]
  %s6 = inlined_call_operand.vmem [shape: bf16[4,16,128], index: 6, kind: input, shape index: {}]
  %s7 = inlined_call_operand.vmem [shape: bf16[128,128], index: 7, kind: input, shape index: {}]
  %s8 = inlined_call_operand.vmem [shape: f32[1,128], index: 8, kind: input, shape index: {}]
  %s9 = inlined_call_operand.vmem [shape: f32[4,16,128], index: 9, kind: output, shape index: {}]
  %s10 = sld [smem:[#allocation0]]
  $region69: #{gcn_forward_batched.1} parent=0
    _
  %s12 = ssub.s32 1, %s10
  %s13 = scalar_select 0, %s12, %s10
  loop: start=0, step=1, limit=6
  $region2: #{gcn_forward_batched.1} parent=0 // loop_pre_header
    _
  $region3: #{gcn_forward_batched.1} parent=0 // loop_header
    %s15 = sphi 0, %s19
    %p16 = scmp.ge.s32.totalorder %s15, 6
    %s25 = sphi 0, %s27
    %s28 = sphi 0, %s25
    %s29 = sphi 0, %s28
    %s45 = sphi 0, %s29
    %s51 = sphi 0, %s53
    %s54 = sphi 0, %s51
    %s55 = sphi 0, %s54
    %s71 = sphi 0, %s55
    %s75 = sphi 0, %s75
    %s77 = sphi 0, %s75
    %s78 = sphi 0, %s77
    %s92 = sphi 0, %s78
    %s96 = sphi 0, %s96
    %s98 = sphi 0, %s96
    %s99 = sphi 0, %s98
    %s113 = sphi 0, %s99
    %s117 = sphi 0, %s117
    %s119 = sphi 0, %s117
    %s120 = sphi 0, %s119
    %s134 = sphi 0, %s120
    %s138 = sphi 0, %s138
    %s140 = sphi 0, %s138
    %s141 = sphi 0, %s140
    %s155 = sphi 0, %s141
    %s161 = sphi 0, %s163
    %s164 = sphi 0, %s161
    %s165 = sphi 0, %s164
    %s181 = sphi 0, %s165
    %s185 = sphi 0, %s185
    %s187 = sphi 0, %s185
    %s188 = sphi 0, %s187
    %s202 = sphi 0, %s188
    %s206 = sphi 0, %s206
    %s208 = sphi 0, %s206
    %s209 = sphi 0, %s208
    %s223 = sphi 0, %s209
    %s229 = sphi 0, %s231
    %s232 = sphi 0, %s229
    %s233 = sphi 0, %s232
    %s249 = sphi 0, %s233
  $region4: #{gcn_forward_batched.1} parent=0 // loop_header_branch
    %18 = sbr.rel (%p16) target = $region8
  $region5: #{gcn_forward_batched.1} parent=0 // loop_body
    %s20 = ssub.s32 %s15, 1
    %s21 = ssub.s32 %s15, 2
    %s22 = sadd.s32 %s15, 1
    %s23 = ssub.s32 %s15, %s22
    %p24 = scmp.eq.s32.totalorder %s23, 0
    %s26 = sadd.s32 %s25, 1
    %s27 = scalar_select %p24, %s25, %s26
    %p30 = pneg %p24
    %p31 = scmp.eq.s32.totalorder %s15, 3
    %p32 = por %p30, %p31
    %p33 = scmp.ne.s32.totalorder %s25, %s28
    %p34 = scmp.eq.s32.totalorder %s15, 0
    %p35 = por %p33, %p34
    %p36 = scmp.ne.s32.totalorder %s25, %s28
    %p37 = scmp.eq.s32.totalorder %s20, 3
    %p38 = por %p36, %p37
    %p39 = scmp.ne.s32.totalorder %s28, %s29
    %p40 = scmp.eq.s32.totalorder %s20, 0
    %p41 = por %p39, %p40
    %p42 = scmp.ne.s32.totalorder %s28, %s29
    %p43 = scmp.eq.s32.totalorder %s21, 3
    %p44 = por %p42, %p43
    %p46 = scmp.ne.s32.totalorder %s29, %s45
    %p47 = scmp.eq.s32.totalorder %s21, 0
    %p48 = por %p46, %p47
    %s49 = ssub.s32 %s15, %s22
    %p50 = scmp.eq.s32.totalorder %s49, 0
    %s52 = sadd.s32 %s51, 1
    %s53 = scalar_select %p50, %s51, %s52
    %p56 = pneg %p50
    %p57 = scmp.eq.s32.totalorder %s15, 3
    %p58 = por %p56, %p57
    %p59 = scmp.ne.s32.totalorder %s51, %s54
    %p60 = scmp.eq.s32.totalorder %s15, 0
    %p61 = por %p59, %p60
    %p62 = scmp.ne.s32.totalorder %s51, %s54
    %p63 = scmp.eq.s32.totalorder %s20, 3
    %p64 = por %p62, %p63
    %p65 = scmp.ne.s32.totalorder %s54, %s55
    %p66 = scmp.eq.s32.totalorder %s20, 0
    %p67 = por %p65, %p66
    %p68 = scmp.ne.s32.totalorder %s54, %s55
    %p69 = scmp.eq.s32.totalorder %s21, 3
    %p70 = por %p68, %p69
    %p72 = scmp.ne.s32.totalorder %s55, %s71
    %p73 = scmp.eq.s32.totalorder %s21, 0
    %p74 = por %p72, %p73
    %s76 = sadd.s32 %s75, 1
    %p79 = scmp.eq.s32.totalorder %s15, 3
    %p80 = scmp.ne.s32.totalorder %s75, %s77
    %p81 = scmp.eq.s32.totalorder %s15, 0
    %p82 = por %p80, %p81
    %p83 = scmp.ne.s32.totalorder %s75, %s77
    %p84 = scmp.eq.s32.totalorder %s20, 3
    %p85 = por %p83, %p84
    %p86 = scmp.ne.s32.totalorder %s77, %s78
    %p87 = scmp.eq.s32.totalorder %s20, 0
    %p88 = por %p86, %p87
    %p89 = scmp.ne.s32.totalorder %s77, %s78
    %p90 = scmp.eq.s32.totalorder %s21, 3
    %p91 = por %p89, %p90
    %p93 = scmp.ne.s32.totalorder %s78, %s92
    %p94 = scmp.eq.s32.totalorder %s21, 0
    %p95 = por %p93, %p94
    %s97 = sadd.s32 %s96, 1
    %p100 = scmp.eq.s32.totalorder %s15, 3
    %p101 = scmp.ne.s32.totalorder %s96, %s98
    %p102 = scmp.eq.s32.totalorder %s15, 0
    %p103 = por %p101, %p102
    %p104 = scmp.ne.s32.totalorder %s96, %s98
    %p105 = scmp.eq.s32.totalorder %s20, 3
    %p106 = por %p104, %p105
    %p107 = scmp.ne.s32.totalorder %s98, %s99
    %p108 = scmp.eq.s32.totalorder %s20, 0
    %p109 = por %p107, %p108
    %p110 = scmp.ne.s32.totalorder %s98, %s99
    %p111 = scmp.eq.s32.totalorder %s21, 3
    %p112 = por %p110, %p111
    %p114 = scmp.ne.s32.totalorder %s99, %s113
    %p115 = scmp.eq.s32.totalorder %s21, 0
    %p116 = por %p114, %p115
    %s118 = sadd.s32 %s117, 1
    %p121 = scmp.eq.s32.totalorder %s15, 3
    %p122 = scmp.ne.s32.totalorder %s117, %s119
    %p123 = scmp.eq.s32.totalorder %s15, 0
    %p124 = por %p122, %p123
    %p125 = scmp.ne.s32.totalorder %s117, %s119
    %p126 = scmp.eq.s32.totalorder %s20, 3
    %p127 = por %p125, %p126
    %p128 = scmp.ne.s32.totalorder %s119, %s120
    %p129 = scmp.eq.s32.totalorder %s20, 0
    %p130 = por %p128, %p129
    %p131 = scmp.ne.s32.totalorder %s119, %s120
    %p132 = scmp.eq.s32.totalorder %s21, 3
    %p133 = por %p131, %p132
    %p135 = scmp.ne.s32.totalorder %s120, %s134
    %p136 = scmp.eq.s32.totalorder %s21, 0
    %p137 = por %p135, %p136
    %s139 = sadd.s32 %s138, 1
    %p142 = scmp.eq.s32.totalorder %s15, 3
    %p143 = scmp.ne.s32.totalorder %s138, %s140
    %p144 = scmp.eq.s32.totalorder %s15, 0
    %p145 = por %p143, %p144
    %p146 = scmp.ne.s32.totalorder %s138, %s140
    %p147 = scmp.eq.s32.totalorder %s20, 3
    %p148 = por %p146, %p147
    %p149 = scmp.ne.s32.totalorder %s140, %s141
    %p150 = scmp.eq.s32.totalorder %s20, 0
    %p151 = por %p149, %p150
    %p152 = scmp.ne.s32.totalorder %s140, %s141
    %p153 = scmp.eq.s32.totalorder %s21, 3
    %p154 = por %p152, %p153
    %p156 = scmp.ne.s32.totalorder %s141, %s155
    %p157 = scmp.eq.s32.totalorder %s21, 0
    %p158 = por %p156, %p157
    %s159 = ssub.s32 %s15, %s22
    %p160 = scmp.eq.s32.totalorder %s159, 0
    %s162 = sadd.s32 %s161, 1
    %s163 = scalar_select %p160, %s161, %s162
    %p166 = pneg %p160
    %p167 = scmp.eq.s32.totalorder %s15, 3
    %p168 = por %p166, %p167
    %p169 = scmp.ne.s32.totalorder %s161, %s164
    %p170 = scmp.eq.s32.totalorder %s15, 0
    %p171 = por %p169, %p170
    %p172 = scmp.ne.s32.totalorder %s161, %s164
    %p173 = scmp.eq.s32.totalorder %s20, 3
    %p174 = por %p172, %p173
    %p175 = scmp.ne.s32.totalorder %s164, %s165
    %p176 = scmp.eq.s32.totalorder %s20, 0
    %p177 = por %p175, %p176
    %p178 = scmp.ne.s32.totalorder %s164, %s165
    %p179 = scmp.eq.s32.totalorder %s21, 3
    %p180 = por %p178, %p179
    %p182 = scmp.ne.s32.totalorder %s165, %s181
    %p183 = scmp.eq.s32.totalorder %s21, 0
    %p184 = por %p182, %p183
    %s186 = sadd.s32 %s185, 1
    %p189 = scmp.eq.s32.totalorder %s15, 3
    %p190 = scmp.ne.s32.totalorder %s185, %s187
    %p191 = scmp.eq.s32.totalorder %s15, 0
    %p192 = por %p190, %p191
    %p193 = scmp.ne.s32.totalorder %s185, %s187
    %p194 = scmp.eq.s32.totalorder %s20, 3
    %p195 = por %p193, %p194
    %p196 = scmp.ne.s32.totalorder %s187, %s188
    %p197 = scmp.eq.s32.totalorder %s20, 0
    %p198 = por %p196, %p197
    %p199 = scmp.ne.s32.totalorder %s187, %s188
    %p200 = scmp.eq.s32.totalorder %s21, 3
    %p201 = por %p199, %p200
    %p203 = scmp.ne.s32.totalorder %s188, %s202
    %p204 = scmp.eq.s32.totalorder %s21, 0
    %p205 = por %p203, %p204
    %s207 = sadd.s32 %s206, 1
    %p210 = scmp.eq.s32.totalorder %s15, 3
    %p211 = scmp.ne.s32.totalorder %s206, %s208
    %p212 = scmp.eq.s32.totalorder %s15, 0
    %p213 = por %p211, %p212
    %p214 = scmp.ne.s32.totalorder %s206, %s208
    %p215 = scmp.eq.s32.totalorder %s20, 3
    %p216 = por %p214, %p215
    %p217 = scmp.ne.s32.totalorder %s208, %s209
    %p218 = scmp.eq.s32.totalorder %s20, 0
    %p219 = por %p217, %p218
    %p220 = scmp.ne.s32.totalorder %s208, %s209
    %p221 = scmp.eq.s32.totalorder %s21, 3
    %p222 = por %p220, %p221
    %p224 = scmp.ne.s32.totalorder %s209, %s223
    %p225 = scmp.eq.s32.totalorder %s21, 0
    %p226 = por %p224, %p225
    %s227 = ssub.s32 %s15, %s22
    %p228 = scmp.eq.s32.totalorder %s227, 0
    %s230 = sadd.s32 %s229, 1
    %s231 = scalar_select %p228, %s229, %s230
    %p234 = pneg %p228
    %p235 = scmp.eq.s32.totalorder %s15, 3
    %p236 = por %p234, %p235
    %p237 = scmp.ne.s32.totalorder %s229, %s232
    %p238 = scmp.eq.s32.totalorder %s15, 0
    %p239 = por %p237, %p238
    %p240 = scmp.ne.s32.totalorder %s229, %s232
    %p241 = scmp.eq.s32.totalorder %s20, 3
    %p242 = por %p240, %p241
    %p243 = scmp.ne.s32.totalorder %s232, %s233
    %p244 = scmp.eq.s32.totalorder %s20, 0
    %p245 = por %p243, %p244
    %p246 = scmp.ne.s32.totalorder %s232, %s233
    %p247 = scmp.eq.s32.totalorder %s21, 3
    %p248 = por %p246, %p247
    %p250 = scmp.ne.s32.totalorder %s233, %s249
    %p251 = scmp.eq.s32.totalorder %s21, 0
    %p252 = por %p250, %p251
    %p253 = scmp.le.s32.totalorder 1, %s15
    %p254 = scmp.lt.s32.totalorder %s15, 5
    %p255 = pnand %p253, %p254
    %p256 = pneg %p255
    // Predicated region
    $region9: #{gcn_forward_batched.1} parent=5 // pred_check
      _
    $region10: #{gcn_forward_batched.1} parent=5 // pred_check_branch
      %258 = sbr.rel (%p255) target = $region12
    $region11: #{gcn_forward_batched.1} parent=5 // pred_region
      %s259 = ssub.s32 %s15, 1
      // Predicated region
      $region13: #{gcn_forward_batched.1} parent=11 // pred_check
        %p260 = pneg %p88
      $region14: #{gcn_forward_batched.1} parent=11 // pred_check_branch
        %262 = sbr.rel (%p260) target = $region16
      $region15: #{gcn_forward_batched.1} parent=11 // pred_region
        _
      $region16: #{gcn_forward_batched.1} parent=11 // pred_fallthru
        _
      // Predicated region
      $region17: #{gcn_forward_batched.1} parent=11 // pred_check
        %p263 = pneg %p109
      $region18: #{gcn_forward_batched.1} parent=11 // pred_check_branch
        %265 = sbr.rel (%p263) target = $region20
      $region19: #{gcn_forward_batched.1} parent=11 // pred_region
        _
      $region20: #{gcn_forward_batched.1} parent=11 // pred_fallthru
        _
      // Predicated region
      $region21: #{gcn_forward_batched.1} parent=11 // pred_check
        %p266 = pneg %p130
      $region22: #{gcn_forward_batched.1} parent=11 // pred_check_branch
        %268 = sbr.rel (%p266) target = $region24
      $region23: #{gcn_forward_batched.1} parent=11 // pred_region
        _
      $region24: #{gcn_forward_batched.1} parent=11 // pred_fallthru
        _
      // Predicated region
      $region25: #{gcn_forward_batched.1} parent=11 // pred_check
        %p269 = pneg %p151
      $region26: #{gcn_forward_batched.1} parent=11 // pred_check_branch
        %271 = sbr.rel (%p269) target = $region28
      $region27: #{gcn_forward_batched.1} parent=11 // pred_region
        _
      $region28: #{gcn_forward_batched.1} parent=11 // pred_fallthru
        _
      // Predicated region
      $region29: #{gcn_forward_batched.1} parent=11 // pred_check
        %p272 = pneg %p198
      $region30: #{gcn_forward_batched.1} parent=11 // pred_check_branch
        %274 = sbr.rel (%p272) target = $region32
      $region31: #{gcn_forward_batched.1} parent=11 // pred_region
        _
      $region32: #{gcn_forward_batched.1} parent=11 // pred_fallthru
        _
      // Predicated region
      $region33: #{gcn_forward_batched.1} parent=11 // pred_check
        %p275 = pneg %p219
      $region34: #{gcn_forward_batched.1} parent=11 // pred_check_branch
        %277 = sbr.rel (%p275) target = $region36
      $region35: #{gcn_forward_batched.1} parent=11 // pred_region
        _
      $region36: #{gcn_forward_batched.1} parent=11 // pred_fallthru
        _
    $region12: #{gcn_forward_batched.1} parent=5 // pred_fallthru
      _
    %p278 = scmp.lt.s32.totalorder %s15, 4
    // Predicated region
    $region37: #{gcn_forward_batched.1} parent=5 // pred_check
      %p279 = pneg %p278
    $region38: #{gcn_forward_batched.1} parent=5 // pred_check_branch
      %281 = sbr.rel (%p279) target = $region40
    $region39: #{gcn_forward_batched.1} parent=5 // pred_region
      // Predicated region
      $region41: #{gcn_forward_batched.1} parent=39 // pred_check
        %p282 = pneg %p35
      $region42: #{gcn_forward_batched.1} parent=39 // pred_check_branch
        %284 = sbr.rel (%p282) target = $region44
      $region43: #{gcn_forward_batched.1} parent=39 // pred_region
        %p285 = scmp.lt.s32.totalorder %s15, 3
        %s286 = scalar_select %p285, %s15, 3
        %s287 = smul.addr %s286, 16
        %s288 = smul.addr %s287, 4
        %s289 = scalar_lea.vmem %s0, %s288
      $region44: #{gcn_forward_batched.1} parent=39 // pred_fallthru
        _
      // Predicated region
      $region45: #{gcn_forward_batched.1} parent=39 // pred_check
        %p290 = pneg %p61
      $region46: #{gcn_forward_batched.1} parent=39 // pred_check_branch
        %292 = sbr.rel (%p290) target = $region48
      $region47: #{gcn_forward_batched.1} parent=39 // pred_region
        %p293 = scmp.lt.s32.totalorder %s15, 3
        %s294 = scalar_select %p293, %s15, 3
        %s295 = smul.addr %s294, 16
        %s296 = smul.addr %s295, 4
        %s297 = scalar_lea.vmem %s1, %s296
      $region48: #{gcn_forward_batched.1} parent=39 // pred_fallthru
        _
      // Predicated region
      $region49: #{gcn_forward_batched.1} parent=39 // pred_check
        %p298 = pneg %p171
      $region50: #{gcn_forward_batched.1} parent=39 // pred_check_branch
        %300 = sbr.rel (%p298) target = $region52
      $region51: #{gcn_forward_batched.1} parent=39 // pred_region
        %p301 = scmp.lt.s32.totalorder %s15, 3
        %s302 = scalar_select %p301, %s15, 3
        %s303 = smul.addr %s302, 2
        %s304 = smul.addr %s303, 4
        %s305 = scalar_lea.vmem %s6, %s304
      $region52: #{gcn_forward_batched.1} parent=39 // pred_fallthru
        _
    $region40: #{gcn_forward_batched.1} parent=5 // pred_fallthru
      _
    %p306 = scmp.le.s32.totalorder 1, %s15
    %p307 = scmp.lt.s32.totalorder %s15, 5
    %p308 = pnand %p306, %p307
    %p309 = pneg %p308
    // Predicated region
    $region53: #{gcn_forward_batched.1} parent=5 // pred_check
      _
    $region54: #{gcn_forward_batched.1} parent=5 // pred_check_branch
      %311 = sbr.rel (%p308) target = $region56
    $region55: #{gcn_forward_batched.1} parent=5 // pred_region
      %s312 = ssub.s32 %s15, 1
      %p313 = scmp.lt.s32.totalorder %s20, 3
      %s314 = scalar_select %p313, %s20, 3
      %s315 = smul.addr %s314, 16
      %s316 = smul.addr %s315, 4
      %s317 = scalar_lea.vmem %s0, %s316
      %p318 = pneg %p41
      %p319 = pneg %p38
      %p320 = scmp.lt.s32.totalorder %s20, 3
      %s321 = scalar_select %p320, %s20, 3
      %s322 = smul.addr %s321, 16
      %s323 = smul.addr %s322, 4
      %s324 = scalar_lea.vmem %s1, %s323
      %p325 = pneg %p67
      %p326 = pneg %p64
      %p327 = pneg %p88
      %p328 = pneg %p85
      %p329 = pneg %p109
      %p330 = pneg %p106
      %p331 = pneg %p130
      %p332 = pneg %p127
      %p333 = pneg %p151
      %p334 = pneg %p148
      %p335 = scmp.lt.s32.totalorder %s20, 3
      %s336 = scalar_select %p335, %s20, 3
      %s337 = smul.addr %s336, 2
      %s338 = smul.addr %s337, 4
      %s339 = scalar_lea.vmem %s6, %s338
      %p340 = pneg %p177
      %p341 = pneg %p174
      %p342 = pneg %p198
      %p343 = pneg %p195
      %p344 = pneg %p219
      %p345 = pneg %p216
      %p346 = pneg %p245
      %p347 = pneg %p242
      %p348 = scmp.lt.s32.totalorder %s20, 3
      %s349 = scalar_select %p348, %s20, 3
      %s350 = smul.addr %s349, 2
      %s351 = smul.addr %s350, 8
      %s352 = scalar_lea.vmem %s9, %s351
      %p353 = scmp.lt.s32.totalorder %s20, 3
      %s354 = scalar_select %p353, %s20, 3
      %s355 = smul.addr %s354, 16
      %s356 = smul.addr %s355, 4
      %s357 = scalar_lea.vmem %s0, %s356
      %p358 = scmp.lt.s32.totalorder %s20, 3
      %s359 = scalar_select %p358, %s20, 3
      %s360 = smul.addr %s359, 16
      %s361 = smul.addr %s360, 4
      %s362 = scalar_lea.vmem %s1, %s361
      %p363 = scmp.lt.s32.totalorder %s20, 3
      %s364 = scalar_select %p363, %s20, 3
      %s365 = smul.addr %s364, 2
      %s366 = smul.addr %s365, 4
      %s367 = scalar_lea.vmem %s6, %s366
      %p368 = scmp.lt.s32.totalorder %s20, 3
      %s369 = scalar_select %p368, %s20, 3
      %s370 = smul.addr %s369, 2
      %s371 = smul.addr %s370, 8
      %s372 = scalar_lea.vmem %s9, %s371
      %v373 = vld [vmem:[%s357] sm:$0xf]
      %v374 = vld [vmem:[%s357 + $0x4] sm:$0xf]
      %v375 = vld [vmem:[%s357 + $0x8] sm:$0xf]
      %v376 = vld [vmem:[%s357 + $0xc] sm:$0xf]
      %v377 = vld [vmem:[%s357 + $0x10] sm:$0xf]
      %v378 = vld [vmem:[%s357 + $0x14] sm:$0xf]
      %v379 = vld [vmem:[%s357 + $0x18] sm:$0xf]
      %v380 = vld [vmem:[%s357 + $0x1c] sm:$0xf]
      %v381 = vld [vmem:[%s357 + $0x20] sm:$0xf]
      %v382 = vld [vmem:[%s357 + $0x24] sm:$0xf]
      %v383 = vld [vmem:[%s357 + $0x28] sm:$0xf]
      %v384 = vld [vmem:[%s357 + $0x2c] sm:$0xf]
      %v385 = vld [vmem:[%s357 + $0x30] sm:$0xf]
      %v386 = vld [vmem:[%s357 + $0x34] sm:$0xf]
      %v387 = vld [vmem:[%s357 + $0x38] sm:$0xf]
      %v388 = vld [vmem:[%s357 + $0x3c] sm:$0xf]
      %v389 = vld [vmem:[%s362] sm:$0xf]
      %v390 = vld [vmem:[%s362 + $0x4] sm:$0xf]
      %v391 = vld [vmem:[%s362 + $0x8] sm:$0xf]
      %v392 = vld [vmem:[%s362 + $0xc] sm:$0xf]
      %v393 = vld [vmem:[%s362 + $0x10] sm:$0xf]
      %v394 = vld [vmem:[%s362 + $0x14] sm:$0xf]
      %v395 = vld [vmem:[%s362 + $0x18] sm:$0xf]
      %v396 = vld [vmem:[%s362 + $0x1c] sm:$0xf]
      %v397 = vld [vmem:[%s362 + $0x20] sm:$0xf]
      %v398 = vld [vmem:[%s362 + $0x24] sm:$0xf]
      %v399 = vld [vmem:[%s362 + $0x28] sm:$0xf]
      %v400 = vld [vmem:[%s362 + $0x2c] sm:$0xf]
      %v401 = vld [vmem:[%s362 + $0x30] sm:$0xf]
      %v402 = vld [vmem:[%s362 + $0x34] sm:$0xf]
      %v403 = vld [vmem:[%s362 + $0x38] sm:$0xf]
      %v404 = vld [vmem:[%s362 + $0x3c] sm:$0xf]
      %v421 = vunpack.c.l.b16 %v373
      %v422 = vunpack.c.l.b16 %v374
      %v423 = vunpack.c.l.b16 %v375
      %v424 = vunpack.c.l.b16 %v376
      %v425 = vunpack.c.l.b16 %v377
      %v426 = vunpack.c.l.b16 %v378
      %v427 = vunpack.c.l.b16 %v379
      %v428 = vunpack.c.l.b16 %v380
      %v429 = vunpack.c.l.b16 %v381
      %v430 = vunpack.c.l.b16 %v382
      %v431 = vunpack.c.l.b16 %v383
      %v432 = vunpack.c.l.b16 %v384
      %v433 = vunpack.c.l.b16 %v385
      %v434 = vunpack.c.l.b16 %v386
      %v435 = vunpack.c.l.b16 %v387
      %v436 = vunpack.c.l.b16 %v388
      %v437 = vpack.c.b16 %v422, %v421
      %v438 = vpack.c.b16 %v424, %v423
      %v439 = vpack.c.b16 %v426, %v425
      %v440 = vpack.c.b16 %v428, %v427
      %v441 = vpack.c.b16 %v430, %v429
      %v442 = vpack.c.b16 %v432, %v431
      %v443 = vpack.c.b16 %v434, %v433
      %v444 = vpack.c.b16 %v436, %v435
      %v469 = vunpack.c.l.b16 %v389
      %v470 = vunpack.c.l.b16 %v390
      %v471 = vunpack.c.l.b16 %v391
      %v472 = vunpack.c.l.b16 %v392
      %v473 = vunpack.c.l.b16 %v393
      %v474 = vunpack.c.l.b16 %v394
      %v475 = vunpack.c.l.b16 %v395
      %v476 = vunpack.c.l.b16 %v396
      %v477 = vunpack.c.l.b16 %v397
      %v478 = vunpack.c.l.b16 %v398
      %v479 = vunpack.c.l.b16 %v399
      %v480 = vunpack.c.l.b16 %v400
      %v481 = vunpack.c.l.b16 %v401
      %v482 = vunpack.c.l.b16 %v402
      %v483 = vunpack.c.l.b16 %v403
      %v484 = vunpack.c.l.b16 %v404
      %v485 = vpack.c.b16 %v470, %v469
      %v486 = vpack.c.b16 %v472, %v471
      %v487 = vpack.c.b16 %v474, %v473
      %v488 = vpack.c.b16 %v476, %v475
      %v489 = vpack.c.b16 %v478, %v477
      %v490 = vpack.c.b16 %v480, %v479
      %v491 = vpack.c.b16 %v482, %v481
      %v492 = vpack.c.b16 %v484, %v483
      %501 = vmatpush.bf16.msra.mxu0 %v492
      %502 = vmatpush.bf16.msra.mxu0 %v491
      %503 = vmatpush.bf16.msra.mxu0 %v490
      %504 = vmatpush.bf16.msra.mxu0 %v489
      %505 = vmatpush.bf16.msra.mxu0 %v488
      %506 = vmatpush.bf16.msra.mxu0 %v487
      %507 = vmatpush.bf16.msra.mxu0 %v486
      %508 = vmatpush.bf16.msra.mxu0 %v485
      %509 = vmatmul.bf16.gmra.mxu0 %v437
      %v510 = vpop.f32.mrf.mxu0
      %v511 = vadd.f32 0.0, %v510
      %v512 = vpop.f32.mrf.mxu0
      %v513 = vadd.f32 0.0, %v512
      %514 = vmatmul.bf16.gmra.mxu0 %v438
      %v515 = vpop.f32.mrf.mxu0
      %v516 = vadd.f32 0.0, %v515
      %v517 = vpop.f32.mrf.mxu0
      %v518 = vadd.f32 0.0, %v517
      %519 = vmatmul.bf16.gmra.mxu0 %v439
      %v520 = vpop.f32.mrf.mxu0
      %v521 = vadd.f32 0.0, %v520
      %v522 = vpop.f32.mrf.mxu0
      %v523 = vadd.f32 0.0, %v522
      %524 = vmatmul.bf16.gmra.mxu0 %v440
      %v525 = vpop.f32.mrf.mxu0
      %v526 = vadd.f32 0.0, %v525
      %v527 = vpop.f32.mrf.mxu0
      %v528 = vadd.f32 0.0, %v527
      %529 = vmatmul.bf16.gmra.mxu0 %v441
      %v530 = vpop.f32.mrf.mxu0
      %v531 = vadd.f32 0.0, %v530
      %v532 = vpop.f32.mrf.mxu0
      %v533 = vadd.f32 0.0, %v532
      %534 = vmatmul.bf16.gmra.mxu0 %v442
      %v535 = vpop.f32.mrf.mxu0
      %v536 = vadd.f32 0.0, %v535
      %v537 = vpop.f32.mrf.mxu0
      %v538 = vadd.f32 0.0, %v537
      %539 = vmatmul.bf16.gmra.mxu0 %v443
      %v540 = vpop.f32.mrf.mxu0
      %v541 = vadd.f32 0.0, %v540
      %v542 = vpop.f32.mrf.mxu0
      %v543 = vadd.f32 0.0, %v542
      %544 = vmatmul.bf16.gmra.mxu0 %v444
      %v545 = vpop.f32.mrf.mxu0
      %v546 = vadd.f32 0.0, %v545
      %v547 = vpop.f32.mrf.mxu0
      %v548 = vadd.f32 0.0, %v547
      %549 = vdwg.mxu0
      %v550 = vpack.c.bf16 %v513, %v511
      %v551 = vpack.c.bf16 %v518, %v516
      %v552 = vpack.c.bf16 %v523, %v521
      %v553 = vpack.c.bf16 %v528, %v526
      %v554 = vpack.c.bf16 %v533, %v531
      %v555 = vpack.c.bf16 %v538, %v536
      %v556 = vpack.c.bf16 %v543, %v541
      %v557 = vpack.c.bf16 %v548, %v546
      %v558 = vld [vmem:[%s2] sm:$0xf]
      %v559 = vld [vmem:[%s2 + $0x4] sm:$0xf]
      %v560 = vld [vmem:[%s2 + $0x8] sm:$0xf]
      %v561 = vld [vmem:[%s2 + $0xc] sm:$0xf]
      %v562 = vld [vmem:[%s2 + $0x10] sm:$0xf]
      %v563 = vld [vmem:[%s2 + $0x14] sm:$0xf]
      %v564 = vld [vmem:[%s2 + $0x18] sm:$0xf]
      %v565 = vld [vmem:[%s2 + $0x1c] sm:$0xf]
      %v566 = vld [vmem:[%s2 + $0x20] sm:$0xf]
      %v567 = vld [vmem:[%s2 + $0x24] sm:$0xf]
      %v568 = vld [vmem:[%s2 + $0x28] sm:$0xf]
      %v569 = vld [vmem:[%s2 + $0x2c] sm:$0xf]
      %v570 = vld [vmem:[%s2 + $0x30] sm:$0xf]
      %v571 = vld [vmem:[%s2 + $0x34] sm:$0xf]
      %v572 = vld [vmem:[%s2 + $0x38] sm:$0xf]
      %v573 = vld [vmem:[%s2 + $0x3c] sm:$0xf]
      %v574 = vld [vmem:[%s2 + $0x40] sm:$0xf]
      %v575 = vld [vmem:[%s2 + $0x44] sm:$0xf]
      %v576 = vld [vmem:[%s2 + $0x48] sm:$0xf]
      %v577 = vld [vmem:[%s2 + $0x4c] sm:$0xf]
      %v578 = vld [vmem:[%s2 + $0x50] sm:$0xf]
      %v579 = vld [vmem:[%s2 + $0x54] sm:$0xf]
      %v580 = vld [vmem:[%s2 + $0x58] sm:$0xf]
      %v581 = vld [vmem:[%s2 + $0x5c] sm:$0xf]
      %v582 = vld [vmem:[%s2 + $0x60] sm:$0xf]
      %v583 = vld [vmem:[%s2 + $0x64] sm:$0xf]
      %v584 = vld [vmem:[%s2 + $0x68] sm:$0xf]
      %v585 = vld [vmem:[%s2 + $0x6c] sm:$0xf]
      %v586 = vld [vmem:[%s2 + $0x70] sm:$0xf]
      %v587 = vld [vmem:[%s2 + $0x74] sm:$0xf]
      %v588 = vld [vmem:[%s2 + $0x78] sm:$0xf]
      %v589 = vld [vmem:[%s2 + $0x7c] sm:$0xf]
      %v606 = vunpack.c.l.b16 %v574
      %v607 = vunpack.c.l.b16 %v575
      %v608 = vunpack.c.l.b16 %v576
      %v609 = vunpack.c.l.b16 %v577
      %v610 = vunpack.c.l.b16 %v578
      %v611 = vunpack.c.l.b16 %v579
      %v612 = vunpack.c.l.b16 %v580
      %v613 = vunpack.c.l.b16 %v581
      %v614 = vunpack.c.l.b16 %v582
      %v615 = vunpack.c.l.b16 %v583
      %v616 = vunpack.c.l.b16 %v584
      %v617 = vunpack.c.l.b16 %v585
      %v618 = vunpack.c.l.b16 %v586
      %v619 = vunpack.c.l.b16 %v587
      %v620 = vunpack.c.l.b16 %v588
      %v621 = vunpack.c.l.b16 %v589
      %v622 = vpack.c.b16 %v607, %v606
      %v623 = vpack.c.b16 %v609, %v608
      %v624 = vpack.c.b16 %v611, %v610
      %v625 = vpack.c.b16 %v613, %v612
      %v626 = vpack.c.b16 %v615, %v614
      %v627 = vpack.c.b16 %v617, %v616
      %v628 = vpack.c.b16 %v619, %v618
      %v629 = vpack.c.b16 %v621, %v620
      %638 = vmatpush.bf16.msra.mxu0 %v629
      %639 = vmatpush.bf16.msra.mxu0 %v628
      %640 = vmatpush.bf16.msra.mxu0 %v627
      %641 = vmatpush.bf16.msra.mxu0 %v626
      %642 = vmatpush.bf16.msra.mxu0 %v625
      %643 = vmatpush.bf16.msra.mxu0 %v624
      %644 = vmatpush.bf16.msra.mxu0 %v623
      %645 = vmatpush.bf16.msra.mxu0 %v622
      %646 = vmatmul.bf16.gmra.mxu0 %v485
      %v647 = vpop.f32.mrf.mxu0
      %v648 = vadd.f32 0.0, %v647
      %v649 = vpop.f32.mrf.mxu0
      %v650 = vadd.f32 0.0, %v649
      %651 = vmatmul.bf16.gmra.mxu0 %v486
      %v652 = vpop.f32.mrf.mxu0
      %v653 = vadd.f32 0.0, %v652
      %v654 = vpop.f32.mrf.mxu0
      %v655 = vadd.f32 0.0, %v654
      %656 = vmatmul.bf16.gmra.mxu0 %v487
      %v657 = vpop.f32.mrf.mxu0
      %v658 = vadd.f32 0.0, %v657
      %v659 = vpop.f32.mrf.mxu0
      %v660 = vadd.f32 0.0, %v659
      %661 = vmatmul.bf16.gmra.mxu0 %v488
      %v662 = vpop.f32.mrf.mxu0
      %v663 = vadd.f32 0.0, %v662
      %v664 = vpop.f32.mrf.mxu0
      %v665 = vadd.f32 0.0, %v664
      %666 = vmatmul.bf16.gmra.mxu0 %v489
      %v667 = vpop.f32.mrf.mxu0
      %v668 = vadd.f32 0.0, %v667
      %v669 = vpop.f32.mrf.mxu0
      %v670 = vadd.f32 0.0, %v669
      %671 = vmatmul.bf16.gmra.mxu0 %v490
      %v672 = vpop.f32.mrf.mxu0
      %v673 = vadd.f32 0.0, %v672
      %v674 = vpop.f32.mrf.mxu0
      %v675 = vadd.f32 0.0, %v674
      %676 = vmatmul.bf16.gmra.mxu0 %v491
      %v677 = vpop.f32.mrf.mxu0
      %v678 = vadd.f32 0.0, %v677
      %v679 = vpop.f32.mrf.mxu0
      %v680 = vadd.f32 0.0, %v679
      %681 = vmatmul.bf16.gmra.mxu0 %v492
      %v682 = vpop.f32.mrf.mxu0
      %v683 = vadd.f32 0.0, %v682
      %v684 = vpop.f32.mrf.mxu0
      %v685 = vadd.f32 0.0, %v684
      %686 = vdwg.mxu0
      %v703 = vunpack.c.l.b16 %v558
      %v704 = vunpack.c.l.b16 %v559
      %v705 = vunpack.c.l.b16 %v560
      %v706 = vunpack.c.l.b16 %v561
      %v707 = vunpack.c.l.b16 %v562
      %v708 = vunpack.c.l.b16 %v563
      %v709 = vunpack.c.l.b16 %v564
      %v710 = vunpack.c.l.b16 %v565
      %v711 = vunpack.c.l.b16 %v566
      %v712 = vunpack.c.l.b16 %v567
      %v713 = vunpack.c.l.b16 %v568
      %v714 = vunpack.c.l.b16 %v569
      %v715 = vunpack.c.l.b16 %v570
      %v716 = vunpack.c.l.b16 %v571
      %v717 = vunpack.c.l.b16 %v572
      %v718 = vunpack.c.l.b16 %v573
      %v719 = vpack.c.b16 %v704, %v703
      %v720 = vpack.c.b16 %v706, %v705
      %v721 = vpack.c.b16 %v708, %v707
      %v722 = vpack.c.b16 %v710, %v709
      %v723 = vpack.c.b16 %v712, %v711
      %v724 = vpack.c.b16 %v714, %v713
      %v725 = vpack.c.b16 %v716, %v715
      %v726 = vpack.c.b16 %v718, %v717
      %735 = vmatpush.bf16.msra.mxu0 %v726
      %736 = vmatpush.bf16.msra.mxu0 %v725
      %737 = vmatpush.bf16.msra.mxu0 %v724
      %738 = vmatpush.bf16.msra.mxu0 %v723
      %739 = vmatpush.bf16.msra.mxu0 %v722
      %740 = vmatpush.bf16.msra.mxu0 %v721
      %741 = vmatpush.bf16.msra.mxu0 %v720
      %742 = vmatpush.bf16.msra.mxu0 %v719
      %743 = vmatmul.bf16.gmra.mxu0 %v550
      %v744 = vpop.f32.mrf.mxu0
      %v745 = vadd.f32 %v648, %v744
      %v746 = vpop.f32.mrf.mxu0
      %v747 = vadd.f32 %v650, %v746
      %748 = vmatmul.bf16.gmra.mxu0 %v551
      %v749 = vpop.f32.mrf.mxu0
      %v750 = vadd.f32 %v653, %v749
      %v751 = vpop.f32.mrf.mxu0
      %v752 = vadd.f32 %v655, %v751
      %753 = vmatmul.bf16.gmra.mxu0 %v552
      %v754 = vpop.f32.mrf.mxu0
      %v755 = vadd.f32 %v658, %v754
      %v756 = vpop.f32.mrf.mxu0
      %v757 = vadd.f32 %v660, %v756
      %758 = vmatmul.bf16.gmra.mxu0 %v553
      %v759 = vpop.f32.mrf.mxu0
      %v760 = vadd.f32 %v663, %v759
      %v761 = vpop.f32.mrf.mxu0
      %v762 = vadd.f32 %v665, %v761
      %763 = vmatmul.bf16.gmra.mxu0 %v554
      %v764 = vpop.f32.mrf.mxu0
      %v765 = vadd.f32 %v668, %v764
      %v766 = vpop.f32.mrf.mxu0
      %v767 = vadd.f32 %v670, %v766
      %768 = vmatmul.bf16.gmra.mxu0 %v555
      %v769 = vpop.f32.mrf.mxu0
      %v770 = vadd.f32 %v673, %v769
      %v771 = vpop.f32.mrf.mxu0
      %v772 = vadd.f32 %v675, %v771
      %773 = vmatmul.bf16.gmra.mxu0 %v556
      %v774 = vpop.f32.mrf.mxu0
      %v775 = vadd.f32 %v678, %v774
      %v776 = vpop.f32.mrf.mxu0
      %v777 = vadd.f32 %v680, %v776
      %778 = vmatmul.bf16.gmra.mxu0 %v557
      %v779 = vpop.f32.mrf.mxu0
      %v780 = vadd.f32 %v683, %v779
      %v781 = vpop.f32.mrf.mxu0
      %v782 = vadd.f32 %v685, %v781
      %783 = vdwg.mxu0
      %v784 = vld [vmem:[%s3] sm:$0x1]
      %v786 = vperm.slane %v784, 0
      %v788 = vadd.f32 %v745, %v786
      %v789 = vadd.f32 %v747, %v786
      %v790 = vadd.f32 %v750, %v786
      %v791 = vadd.f32 %v752, %v786
      %v792 = vadd.f32 %v755, %v786
      %v793 = vadd.f32 %v757, %v786
      %v794 = vadd.f32 %v760, %v786
      %v795 = vadd.f32 %v762, %v786
      %v796 = vadd.f32 %v765, %v786
      %v797 = vadd.f32 %v767, %v786
      %v798 = vadd.f32 %v770, %v786
      %v799 = vadd.f32 %v772, %v786
      %v800 = vadd.f32 %v775, %v786
      %v801 = vadd.f32 %v777, %v786
      %v802 = vadd.f32 %v780, %v786
      %v803 = vadd.f32 %v782, %v786
      %v804 = vmax.f32 %v788, 0.0
      %v805 = vmax.f32 %v789, 0.0
      %v806 = vmax.f32 %v790, 0.0
      %v807 = vmax.f32 %v791, 0.0
      %v808 = vmax.f32 %v792, 0.0
      %v809 = vmax.f32 %v793, 0.0
      %v810 = vmax.f32 %v794, 0.0
      %v811 = vmax.f32 %v795, 0.0
      %v812 = vmax.f32 %v796, 0.0
      %v813 = vmax.f32 %v797, 0.0
      %v814 = vmax.f32 %v798, 0.0
      %v815 = vmax.f32 %v799, 0.0
      %v816 = vmax.f32 %v800, 0.0
      %v817 = vmax.f32 %v801, 0.0
      %v818 = vmax.f32 %v802, 0.0
      %v819 = vmax.f32 %v803, 0.0
      %v820 = vld [vmem:[%s4] sm:$0xf]
      %v821 = vld [vmem:[%s4 + $0x4] sm:$0xf]
      %v822 = vld [vmem:[%s4 + $0x8] sm:$0xf]
      %v823 = vld [vmem:[%s4 + $0xc] sm:$0xf]
      %v824 = vld [vmem:[%s4 + $0x10] sm:$0xf]
      %v825 = vld [vmem:[%s4 + $0x14] sm:$0xf]
      %v826 = vld [vmem:[%s4 + $0x18] sm:$0xf]
      %v827 = vld [vmem:[%s4 + $0x1c] sm:$0xf]
      %v828 = vld [vmem:[%s4 + $0x20] sm:$0xf]
      %v829 = vld [vmem:[%s4 + $0x24] sm:$0xf]
      %v830 = vld [vmem:[%s4 + $0x28] sm:$0xf]
      %v831 = vld [vmem:[%s4 + $0x2c] sm:$0xf]
      %v832 = vld [vmem:[%s4 + $0x30] sm:$0xf]
      %v833 = vld [vmem:[%s4 + $0x34] sm:$0xf]
      %v834 = vld [vmem:[%s4 + $0x38] sm:$0xf]
      %v835 = vld [vmem:[%s4 + $0x3c] sm:$0xf]
      %v836 = vld [vmem:[%s4 + $0x40] sm:$0xf]
      %v837 = vld [vmem:[%s4 + $0x44] sm:$0xf]
      %v838 = vld [vmem:[%s4 + $0x48] sm:$0xf]
      %v839 = vld [vmem:[%s4 + $0x4c] sm:$0xf]
      %v840 = vld [vmem:[%s4 + $0x50] sm:$0xf]
      %v841 = vld [vmem:[%s4 + $0x54] sm:$0xf]
      %v842 = vld [vmem:[%s4 + $0x58] sm:$0xf]
      %v843 = vld [vmem:[%s4 + $0x5c] sm:$0xf]
      %v844 = vld [vmem:[%s4 + $0x60] sm:$0xf]
      %v845 = vld [vmem:[%s4 + $0x64] sm:$0xf]
      %v846 = vld [vmem:[%s4 + $0x68] sm:$0xf]
      %v847 = vld [vmem:[%s4 + $0x6c] sm:$0xf]
      %v848 = vld [vmem:[%s4 + $0x70] sm:$0xf]
      %v849 = vld [vmem:[%s4 + $0x74] sm:$0xf]
      %v850 = vld [vmem:[%s4 + $0x78] sm:$0xf]
      %v851 = vld [vmem:[%s4 + $0x7c] sm:$0xf]
      %v852 = vld [vmem:[%s5] sm:$0x1]
      %v854 = vperm.slane %v852, 0
      %v856 = vpack.c.bf16 %v805, %v804
      %v857 = vpack.c.bf16 %v807, %v806
      %v858 = vpack.c.bf16 %v809, %v808
      %v859 = vpack.c.bf16 %v811, %v810
      %v860 = vpack.c.bf16 %v813, %v812
      %v861 = vpack.c.bf16 %v815, %v814
      %v862 = vpack.c.bf16 %v817, %v816
      %v863 = vpack.c.bf16 %v819, %v818
      %864 = vmatpush.bf16.msra.mxu0 %v863
      %865 = vmatpush.bf16.msra.mxu0 %v862
      %866 = vmatpush.bf16.msra.mxu0 %v861
      %867 = vmatpush.bf16.msra.mxu0 %v860
      %868 = vmatpush.bf16.msra.mxu0 %v859
      %869 = vmatpush.bf16.msra.mxu0 %v858
      %870 = vmatpush.bf16.msra.mxu0 %v857
      %871 = vmatpush.bf16.msra.mxu0 %v856
      %872 = vmatmul.bf16.gmra.mxu0 %v437
      %v873 = vpop.f32.mrf.mxu0
      %v874 = vadd.f32 0.0, %v873
      %v875 = vpop.f32.mrf.mxu0
      %v876 = vadd.f32 0.0, %v875
      %877 = vmatmul.bf16.gmra.mxu0 %v438
      %v878 = vpop.f32.mrf.mxu0
      %v879 = vadd.f32 0.0, %v878
      %v880 = vpop.f32.mrf.mxu0
      %v881 = vadd.f32 0.0, %v880
      %882 = vmatmul.bf16.gmra.mxu0 %v439
      %v883 = vpop.f32.mrf.mxu0
      %v884 = vadd.f32 0.0, %v883
      %v885 = vpop.f32.mrf.mxu0
      %v886 = vadd.f32 0.0, %v885
      %887 = vmatmul.bf16.gmra.mxu0 %v440
      %v888 = vpop.f32.mrf.mxu0
      %v889 = vadd.f32 0.0, %v888
      %v890 = vpop.f32.mrf.mxu0
      %v891 = vadd.f32 0.0, %v890
      %892 = vmatmul.bf16.gmra.mxu0 %v441
      %v893 = vpop.f32.mrf.mxu0
      %v894 = vadd.f32 0.0, %v893
      %v895 = vpop.f32.mrf.mxu0
      %v896 = vadd.f32 0.0, %v895
      %897 = vmatmul.bf16.gmra.mxu0 %v442
      %v898 = vpop.f32.mrf.mxu0
      %v899 = vadd.f32 0.0, %v898
      %v900 = vpop.f32.mrf.mxu0
      %v901 = vadd.f32 0.0, %v900
      %902 = vmatmul.bf16.gmra.mxu0 %v443
      %v903 = vpop.f32.mrf.mxu0
      %v904 = vadd.f32 0.0, %v903
      %v905 = vpop.f32.mrf.mxu0
      %v906 = vadd.f32 0.0, %v905
      %907 = vmatmul.bf16.gmra.mxu0 %v444
      %v908 = vpop.f32.mrf.mxu0
      %v909 = vadd.f32 0.0, %v908
      %v910 = vpop.f32.mrf.mxu0
      %v911 = vadd.f32 0.0, %v910
      %912 = vdwg.mxu0
      %v913 = vpack.c.bf16 %v876, %v874
      %v914 = vpack.c.bf16 %v881, %v879
      %v915 = vpack.c.bf16 %v886, %v884
      %v916 = vpack.c.bf16 %v891, %v889
      %v917 = vpack.c.bf16 %v896, %v894
      %v918 = vpack.c.bf16 %v901, %v899
      %v919 = vpack.c.bf16 %v906, %v904
      %v920 = vpack.c.bf16 %v911, %v909
      %v937 = vunpack.c.l.b16 %v836
      %v938 = vunpack.c.l.b16 %v837
      %v939 = vunpack.c.l.b16 %v838
      %v940 = vunpack.c.l.b16 %v839
      %v941 = vunpack.c.l.b16 %v840
      %v942 = vunpack.c.l.b16 %v841
      %v943 = vunpack.c.l.b16 %v842
      %v944 = vunpack.c.l.b16 %v843
      %v945 = vunpack.c.l.b16 %v844
      %v946 = vunpack.c.l.b16 %v845
      %v947 = vunpack.c.l.b16 %v846
      %v948 = vunpack.c.l.b16 %v847
      %v949 = vunpack.c.l.b16 %v848
      %v950 = vunpack.c.l.b16 %v849
      %v951 = vunpack.c.l.b16 %v850
      %v952 = vunpack.c.l.b16 %v851
      %v953 = vpack.c.b16 %v938, %v937
      %v954 = vpack.c.b16 %v940, %v939
      %v955 = vpack.c.b16 %v942, %v941
      %v956 = vpack.c.b16 %v944, %v943
      %v957 = vpack.c.b16 %v946, %v945
      %v958 = vpack.c.b16 %v948, %v947
      %v959 = vpack.c.b16 %v950, %v949
      %v960 = vpack.c.b16 %v952, %v951
      %969 = vmatpush.bf16.msra.mxu0 %v960
      %970 = vmatpush.bf16.msra.mxu0 %v959
      %971 = vmatpush.bf16.msra.mxu0 %v958
      %972 = vmatpush.bf16.msra.mxu0 %v957
      %973 = vmatpush.bf16.msra.mxu0 %v956
      %974 = vmatpush.bf16.msra.mxu0 %v955
      %975 = vmatpush.bf16.msra.mxu0 %v954
      %976 = vmatpush.bf16.msra.mxu0 %v953
      %977 = vmatmul.bf16.gmra.mxu0 %v856
      %v978 = vpop.f32.mrf.mxu0
      %v979 = vadd.f32 0.0, %v978
      %v980 = vpop.f32.mrf.mxu0
      %v981 = vadd.f32 0.0, %v980
      %982 = vmatmul.bf16.gmra.mxu0 %v857
      %v983 = vpop.f32.mrf.mxu0
      %v984 = vadd.f32 0.0, %v983
      %v985 = vpop.f32.mrf.mxu0
      %v986 = vadd.f32 0.0, %v985
      %987 = vmatmul.bf16.gmra.mxu0 %v858
      %v988 = vpop.f32.mrf.mxu0
      %v989 = vadd.f32 0.0, %v988
      %v990 = vpop.f32.mrf.mxu0
      %v991 = vadd.f32 0.0, %v990
      %992 = vmatmul.bf16.gmra.mxu0 %v859
      %v993 = vpop.f32.mrf.mxu0
      %v994 = vadd.f32 0.0, %v993
      %v995 = vpop.f32.mrf.mxu0
      %v996 = vadd.f32 0.0, %v995
      %997 = vmatmul.bf16.gmra.mxu0 %v860
      %v998 = vpop.f32.mrf.mxu0
      %v999 = vadd.f32 0.0, %v998
      %v1000 = vpop.f32.mrf.mxu0
      %v1001 = vadd.f32 0.0, %v1000
      %1002 = vmatmul.bf16.gmra.mxu0 %v861
      %v1003 = vpop.f32.mrf.mxu0
      %v1004 = vadd.f32 0.0, %v1003
      %v1005 = vpop.f32.mrf.mxu0
      %v1006 = vadd.f32 0.0, %v1005
      %1007 = vmatmul.bf16.gmra.mxu0 %v862
      %v1008 = vpop.f32.mrf.mxu0
      %v1009 = vadd.f32 0.0, %v1008
      %v1010 = vpop.f32.mrf.mxu0
      %v1011 = vadd.f32 0.0, %v1010
      %1012 = vmatmul.bf16.gmra.mxu0 %v863
      %v1013 = vpop.f32.mrf.mxu0
      %v1014 = vadd.f32 0.0, %v1013
      %v1015 = vpop.f32.mrf.mxu0
      %v1016 = vadd.f32 0.0, %v1015
      %1017 = vdwg.mxu0
      %v1034 = vunpack.c.l.b16 %v820
      %v1035 = vunpack.c.l.b16 %v821
      %v1036 = vunpack.c.l.b16 %v822
      %v1037 = vunpack.c.l.b16 %v823
      %v1038 = vunpack.c.l.b16 %v824
      %v1039 = vunpack.c.l.b16 %v825
      %v1040 = vunpack.c.l.b16 %v826
      %v1041 = vunpack.c.l.b16 %v827
      %v1042 = vunpack.c.l.b16 %v828
      %v1043 = vunpack.c.l.b16 %v829
      %v1044 = vunpack.c.l.b16 %v830
      %v1045 = vunpack.c.l.b16 %v831
      %v1046 = vunpack.c.l.b16 %v832
      %v1047 = vunpack.c.l.b16 %v833
      %v1048 = vunpack.c.l.b16 %v834
      %v1049 = vunpack.c.l.b16 %v835
      %v1050 = vpack.c.b16 %v1035, %v1034
      %v1051 = vpack.c.b16 %v1037, %v1036
      %v1052 = vpack.c.b16 %v1039, %v1038
      %v1053 = vpack.c.b16 %v1041, %v1040
      %v1054 = vpack.c.b16 %v1043, %v1042
      %v1055 = vpack.c.b16 %v1045, %v1044
      %v1056 = vpack.c.b16 %v1047, %v1046
      %v1057 = vpack.c.b16 %v1049, %v1048
      %1066 = vmatpush.bf16.msra.mxu0 %v1057
      %1067 = vmatpush.bf16.msra.mxu0 %v1056
      %1068 = vmatpush.bf16.msra.mxu0 %v1055
      %1069 = vmatpush.bf16.msra.mxu0 %v1054
      %1070 = vmatpush.bf16.msra.mxu0 %v1053
      %1071 = vmatpush.bf16.msra.mxu0 %v1052
      %1072 = vmatpush.bf16.msra.mxu0 %v1051
      %1073 = vmatpush.bf16.msra.mxu0 %v1050
      %1074 = vmatmul.bf16.gmra.mxu0 %v913
      %v1075 = vpop.f32.mrf.mxu0
      %v1076 = vadd.f32 %v979, %v1075
      %v1077 = vpop.f32.mrf.mxu0
      %v1078 = vadd.f32 %v981, %v1077
      %1079 = vmatmul.bf16.gmra.mxu0 %v914
      %v1080 = vpop.f32.mrf.mxu0
      %v1081 = vadd.f32 %v984, %v1080
      %v1082 = vpop.f32.mrf.mxu0
      %v1083 = vadd.f32 %v986, %v1082
      %1084 = vmatmul.bf16.gmra.mxu0 %v915
      %v1085 = vpop.f32.mrf.mxu0
      %v1086 = vadd.f32 %v989, %v1085
      %v1087 = vpop.f32.mrf.mxu0
      %v1088 = vadd.f32 %v991, %v1087
      %1089 = vmatmul.bf16.gmra.mxu0 %v916
      %v1090 = vpop.f32.mrf.mxu0
      %v1091 = vadd.f32 %v994, %v1090
      %v1092 = vpop.f32.mrf.mxu0
      %v1093 = vadd.f32 %v996, %v1092
      %1094 = vmatmul.bf16.gmra.mxu0 %v917
      %v1095 = vpop.f32.mrf.mxu0
      %v1096 = vadd.f32 %v999, %v1095
      %v1097 = vpop.f32.mrf.mxu0
      %v1098 = vadd.f32 %v1001, %v1097
      %1099 = vmatmul.bf16.gmra.mxu0 %v918
      %v1100 = vpop.f32.mrf.mxu0
      %v1101 = vadd.f32 %v1004, %v1100
      %v1102 = vpop.f32.mrf.mxu0
      %v1103 = vadd.f32 %v1006, %v1102
      %1104 = vmatmul.bf16.gmra.mxu0 %v919
      %v1105 = vpop.f32.mrf.mxu0
      %v1106 = vadd.f32 %v1009, %v1105
      %v1107 = vpop.f32.mrf.mxu0
      %v1108 = vadd.f32 %v1011, %v1107
      %1109 = vmatmul.bf16.gmra.mxu0 %v920
      %v1110 = vpop.f32.mrf.mxu0
      %v1111 = vadd.f32 %v1014, %v1110
      %v1112 = vpop.f32.mrf.mxu0
      %v1113 = vadd.f32 %v1016, %v1112
      %1114 = vdwg.mxu0
      %v1115 = vadd.f32 %v1076, %v854
      %v1116 = vadd.f32 %v1078, %v854
      %v1117 = vadd.f32 %v1081, %v854
      %v1118 = vadd.f32 %v1083, %v854
      %v1119 = vadd.f32 %v1086, %v854
      %v1120 = vadd.f32 %v1088, %v854
      %v1121 = vadd.f32 %v1091, %v854
      %v1122 = vadd.f32 %v1093, %v854
      %v1123 = vadd.f32 %v1096, %v854
      %v1124 = vadd.f32 %v1098, %v854
      %v1125 = vadd.f32 %v1101, %v854
      %v1126 = vadd.f32 %v1103, %v854
      %v1127 = vadd.f32 %v1106, %v854
      %v1128 = vadd.f32 %v1108, %v854
      %v1129 = vadd.f32 %v1111, %v854
      %v1130 = vadd.f32 %v1113, %v854
      %v1131 = vmax.f32 %v1115, 0.0
      %v1132 = vmax.f32 %v1116, 0.0
      %v1133 = vmax.f32 %v1117, 0.0
      %v1134 = vmax.f32 %v1118, 0.0
      %v1135 = vmax.f32 %v1119, 0.0
      %v1136 = vmax.f32 %v1120, 0.0
      %v1137 = vmax.f32 %v1121, 0.0
      %v1138 = vmax.f32 %v1122, 0.0
      %v1139 = vmax.f32 %v1123, 0.0
      %v1140 = vmax.f32 %v1124, 0.0
      %v1141 = vmax.f32 %v1125, 0.0
      %v1142 = vmax.f32 %v1126, 0.0
      %v1143 = vmax.f32 %v1127, 0.0
      %v1144 = vmax.f32 %v1128, 0.0
      %v1145 = vmax.f32 %v1129, 0.0
      %v1146 = vmax.f32 %v1130, 0.0
      %v1147 = vadd.f32 %v1131, %v804
      %v1148 = vadd.f32 %v1132, %v805
      %v1149 = vadd.f32 %v1133, %v806
      %v1150 = vadd.f32 %v1134, %v807
      %v1151 = vadd.f32 %v1135, %v808
      %v1152 = vadd.f32 %v1136, %v809
      %v1153 = vadd.f32 %v1137, %v810
      %v1154 = vadd.f32 %v1138, %v811
      %v1155 = vadd.f32 %v1139, %v812
      %v1156 = vadd.f32 %v1140, %v813
      %v1157 = vadd.f32 %v1141, %v814
      %v1158 = vadd.f32 %v1142, %v815
      %v1159 = vadd.f32 %v1143, %v816
      %v1160 = vadd.f32 %v1144, %v817
      %v1161 = vadd.f32 %v1145, %v818
      %v1162 = vadd.f32 %v1146, %v819
      %v1163 = vpack.c.bf16 %v1148, %v1147
      %v1164 = vpack.c.bf16 %v1150, %v1149
      %v1165 = vpack.c.bf16 %v1152, %v1151
      %v1166 = vpack.c.bf16 %v1154, %v1153
      %v1167 = vpack.c.bf16 %v1156, %v1155
      %v1168 = vpack.c.bf16 %v1158, %v1157
      %v1169 = vpack.c.bf16 %v1160, %v1159
      %v1170 = vpack.c.bf16 %v1162, %v1161
      %1171 = vmatpush.bf16.msra.mxu0 %v1170
      %1172 = vmatpush.bf16.msra.mxu0 %v1169
      %1173 = vmatpush.bf16.msra.mxu0 %v1168
      %1174 = vmatpush.bf16.msra.mxu0 %v1167
      %1175 = vmatpush.bf16.msra.mxu0 %v1166
      %1176 = vmatpush.bf16.msra.mxu0 %v1165
      %1177 = vmatpush.bf16.msra.mxu0 %v1164
      %1178 = vmatpush.bf16.msra.mxu0 %v1163
      %1179 = vmatmul.bf16.gmra.mxu0 %v437
      %v1180 = vpop.f32.mrf.mxu0
      %v1181 = vadd.f32 0.0, %v1180
      %v1182 = vpop.f32.mrf.mxu0
      %v1183 = vadd.f32 0.0, %v1182
      %1184 = vmatmul.bf16.gmra.mxu0 %v438
      %v1185 = vpop.f32.mrf.mxu0
      %v1186 = vadd.f32 0.0, %v1185
      %v1187 = vpop.f32.mrf.mxu0
      %v1188 = vadd.f32 0.0, %v1187
      %1189 = vmatmul.bf16.gmra.mxu0 %v439
      %v1190 = vpop.f32.mrf.mxu0
      %v1191 = vadd.f32 0.0, %v1190
      %v1192 = vpop.f32.mrf.mxu0
      %v1193 = vadd.f32 0.0, %v1192
      %1194 = vmatmul.bf16.gmra.mxu0 %v440
      %v1195 = vpop.f32.mrf.mxu0
      %v1196 = vadd.f32 0.0, %v1195
      %v1197 = vpop.f32.mrf.mxu0
      %v1198 = vadd.f32 0.0, %v1197
      %1199 = vmatmul.bf16.gmra.mxu0 %v441
      %v1200 = vpop.f32.mrf.mxu0
      %v1201 = vadd.f32 0.0, %v1200
      %v1202 = vpop.f32.mrf.mxu0
      %v1203 = vadd.f32 0.0, %v1202
      %1204 = vmatmul.bf16.gmra.mxu0 %v442
      %v1205 = vpop.f32.mrf.mxu0
      %v1206 = vadd.f32 0.0, %v1205
      %v1207 = vpop.f32.mrf.mxu0
      %v1208 = vadd.f32 0.0, %v1207
      %1209 = vmatmul.bf16.gmra.mxu0 %v443
      %v1210 = vpop.f32.mrf.mxu0
      %v1211 = vadd.f32 0.0, %v1210
      %v1212 = vpop.f32.mrf.mxu0
      %v1213 = vadd.f32 0.0, %v1212
      %1214 = vmatmul.bf16.gmra.mxu0 %v444
      %v1215 = vpop.f32.mrf.mxu0
      %v1216 = vadd.f32 0.0, %v1215
      %v1217 = vpop.f32.mrf.mxu0
      %v1218 = vadd.f32 0.0, %v1217
      %1219 = vdwg.mxu0
      %v1220 = vpack.c.bf16 %v1183, %v1181
      %v1221 = vpack.c.bf16 %v1188, %v1186
      %v1222 = vpack.c.bf16 %v1193, %v1191
      %v1223 = vpack.c.bf16 %v1198, %v1196
      %v1224 = vpack.c.bf16 %v1203, %v1201
      %v1225 = vpack.c.bf16 %v1208, %v1206
      %v1226 = vpack.c.bf16 %v1213, %v1211
      %v1227 = vpack.c.bf16 %v1218, %v1216
      %1228 = vmatpush.bf16.msra.mxu0 %v960
      %1229 = vmatpush.bf16.msra.mxu0 %v959
      %1230 = vmatpush.bf16.msra.mxu0 %v958
      %1231 = vmatpush.bf16.msra.mxu0 %v957
      %1232 = vmatpush.bf16.msra.mxu0 %v956
      %1233 = vmatpush.bf16.msra.mxu0 %v955
      %1234 = vmatpush.bf16.msra.mxu0 %v954
      %1235 = vmatpush.bf16.msra.mxu0 %v953
      %1236 = vmatmul.bf16.gmra.mxu0 %v1163
      %v1237 = vpop.f32.mrf.mxu0
      %v1238 = vadd.f32 0.0, %v1237
      %v1239 = vpop.f32.mrf.mxu0
      %v1240 = vadd.f32 0.0, %v1239
      %1241 = vmatmul.bf16.gmra.mxu0 %v1164
      %v1242 = vpop.f32.mrf.mxu0
      %v1243 = vadd.f32 0.0, %v1242
      %v1244 = vpop.f32.mrf.mxu0
      %v1245 = vadd.f32 0.0, %v1244
      %1246 = vmatmul.bf16.gmra.mxu0 %v1165
      %v1247 = vpop.f32.mrf.mxu0
      %v1248 = vadd.f32 0.0, %v1247
      %v1249 = vpop.f32.mrf.mxu0
      %v1250 = vadd.f32 0.0, %v1249
      %1251 = vmatmul.bf16.gmra.mxu0 %v1166
      %v1252 = vpop.f32.mrf.mxu0
      %v1253 = vadd.f32 0.0, %v1252
      %v1254 = vpop.f32.mrf.mxu0
      %v1255 = vadd.f32 0.0, %v1254
      %1256 = vmatmul.bf16.gmra.mxu0 %v1167
      %v1257 = vpop.f32.mrf.mxu0
      %v1258 = vadd.f32 0.0, %v1257
      %v1259 = vpop.f32.mrf.mxu0
      %v1260 = vadd.f32 0.0, %v1259
      %1261 = vmatmul.bf16.gmra.mxu0 %v1168
      %v1262 = vpop.f32.mrf.mxu0
      %v1263 = vadd.f32 0.0, %v1262
      %v1264 = vpop.f32.mrf.mxu0
      %v1265 = vadd.f32 0.0, %v1264
      %1266 = vmatmul.bf16.gmra.mxu0 %v1169
      %v1267 = vpop.f32.mrf.mxu0
      %v1268 = vadd.f32 0.0, %v1267
      %v1269 = vpop.f32.mrf.mxu0
      %v1270 = vadd.f32 0.0, %v1269
      %1271 = vmatmul.bf16.gmra.mxu0 %v1170
      %v1272 = vpop.f32.mrf.mxu0
      %v1273 = vadd.f32 0.0, %v1272
      %v1274 = vpop.f32.mrf.mxu0
      %v1275 = vadd.f32 0.0, %v1274
      %1276 = vdwg.mxu0
      %1277 = vmatpush.bf16.msra.mxu0 %v1057
      %1278 = vmatpush.bf16.msra.mxu0 %v1056
      %1279 = vmatpush.bf16.msra.mxu0 %v1055
      %1280 = vmatpush.bf16.msra.mxu0 %v1054
      %1281 = vmatpush.bf16.msra.mxu0 %v1053
      %1282 = vmatpush.bf16.msra.mxu0 %v1052
      %1283 = vmatpush.bf16.msra.mxu0 %v1051
      %1284 = vmatpush.bf16.msra.mxu0 %v1050
      %1285 = vmatmul.bf16.gmra.mxu0 %v1220
      %v1286 = vpop.f32.mrf.mxu0
      %v1287 = vadd.f32 %v1238, %v1286
      %v1288 = vpop.f32.mrf.mxu0
      %v1289 = vadd.f32 %v1240, %v1288
      %1290 = vmatmul.bf16.gmra.mxu0 %v1221
      %v1291 = vpop.f32.mrf.mxu0
      %v1292 = vadd.f32 %v1243, %v1291
      %v1293 = vpop.f32.mrf.mxu0
      %v1294 = vadd.f32 %v1245, %v1293
      %1295 = vmatmul.bf16.gmra.mxu0 %v1222
      %v1296 = vpop.f32.mrf.mxu0
      %v1297 = vadd.f32 %v1248, %v1296
      %v1298 = vpop.f32.mrf.mxu0
      %v1299 = vadd.f32 %v1250, %v1298
      %1300 = vmatmul.bf16.gmra.mxu0 %v1223
      %v1301 = vpop.f32.mrf.mxu0
      %v1302 = vadd.f32 %v1253, %v1301
      %v1303 = vpop.f32.mrf.mxu0
      %v1304 = vadd.f32 %v1255, %v1303
      %1305 = vmatmul.bf16.gmra.mxu0 %v1224
      %v1306 = vpop.f32.mrf.mxu0
      %v1307 = vadd.f32 %v1258, %v1306
      %v1308 = vpop.f32.mrf.mxu0
      %v1309 = vadd.f32 %v1260, %v1308
      %1310 = vmatmul.bf16.gmra.mxu0 %v1225
      %v1311 = vpop.f32.mrf.mxu0
      %v1312 = vadd.f32 %v1263, %v1311
      %v1313 = vpop.f32.mrf.mxu0
      %v1314 = vadd.f32 %v1265, %v1313
      %1315 = vmatmul.bf16.gmra.mxu0 %v1226
      %v1316 = vpop.f32.mrf.mxu0
      %v1317 = vadd.f32 %v1268, %v1316
      %v1318 = vpop.f32.mrf.mxu0
      %v1319 = vadd.f32 %v1270, %v1318
      %1320 = vmatmul.bf16.gmra.mxu0 %v1227
      %v1321 = vpop.f32.mrf.mxu0
      %v1322 = vadd.f32 %v1273, %v1321
      %v1323 = vpop.f32.mrf.mxu0
      %v1324 = vadd.f32 %v1275, %v1323
      %1325 = vdwg.mxu0
      %v1326 = vadd.f32 %v1287, %v854
      %v1327 = vadd.f32 %v1289, %v854
      %v1328 = vadd.f32 %v1292, %v854
      %v1329 = vadd.f32 %v1294, %v854
      %v1330 = vadd.f32 %v1297, %v854
      %v1331 = vadd.f32 %v1299, %v854
      %v1332 = vadd.f32 %v1302, %v854
      %v1333 = vadd.f32 %v1304, %v854
      %v1334 = vadd.f32 %v1307, %v854
      %v1335 = vadd.f32 %v1309, %v854
      %v1336 = vadd.f32 %v1312, %v854
      %v1337 = vadd.f32 %v1314, %v854
      %v1338 = vadd.f32 %v1317, %v854
      %v1339 = vadd.f32 %v1319, %v854
      %v1340 = vadd.f32 %v1322, %v854
      %v1341 = vadd.f32 %v1324, %v854
      %v1342 = vmax.f32 %v1326, 0.0
      %v1343 = vmax.f32 %v1327, 0.0
      %v1344 = vmax.f32 %v1328, 0.0
      %v1345 = vmax.f32 %v1329, 0.0
      %v1346 = vmax.f32 %v1330, 0.0
      %v1347 = vmax.f32 %v1331, 0.0
      %v1348 = vmax.f32 %v1332, 0.0
      %v1349 = vmax.f32 %v1333, 0.0
      %v1350 = vmax.f32 %v1334, 0.0
      %v1351 = vmax.f32 %v1335, 0.0
      %v1352 = vmax.f32 %v1336, 0.0
      %v1353 = vmax.f32 %v1337, 0.0
      %v1354 = vmax.f32 %v1338, 0.0
      %v1355 = vmax.f32 %v1339, 0.0
      %v1356 = vmax.f32 %v1340, 0.0
      %v1357 = vmax.f32 %v1341, 0.0
      %v1358 = vadd.f32 %v1342, %v1147
      %v1359 = vadd.f32 %v1343, %v1148
      %v1360 = vadd.f32 %v1344, %v1149
      %v1361 = vadd.f32 %v1345, %v1150
      %v1362 = vadd.f32 %v1346, %v1151
      %v1363 = vadd.f32 %v1347, %v1152
      %v1364 = vadd.f32 %v1348, %v1153
      %v1365 = vadd.f32 %v1349, %v1154
      %v1366 = vadd.f32 %v1350, %v1155
      %v1367 = vadd.f32 %v1351, %v1156
      %v1368 = vadd.f32 %v1352, %v1157
      %v1369 = vadd.f32 %v1353, %v1158
      %v1370 = vadd.f32 %v1354, %v1159
      %v1371 = vadd.f32 %v1355, %v1160
      %v1372 = vadd.f32 %v1356, %v1161
      %v1373 = vadd.f32 %v1357, %v1162
      %v1374 = vld [vmem:[%s367] sm:$0xf]
      %v1375 = vld [vmem:[%s367 + $0x4] sm:$0xf]
      %v1376 = vpack.c.bf16 %v1359, %v1358
      %v1377 = vpack.c.bf16 %v1361, %v1360
      %v1378 = vpack.c.bf16 %v1363, %v1362
      %v1379 = vpack.c.bf16 %v1365, %v1364
      %v1380 = vpack.c.bf16 %v1367, %v1366
      %v1381 = vpack.c.bf16 %v1369, %v1368
      %v1382 = vpack.c.bf16 %v1371, %v1370
      %v1383 = vpack.c.bf16 %v1373, %v1372
      %v1386 = vunpack.c.l.b16 %v1374
      %v1387 = vunpack.c.l.b16 %v1375
      %v1388 = vpack.c.b16 %v1387, %v1386
      %1390 = vmatpush.bf16.msra.mxu0 %v1383
      %1391 = vmatpush.bf16.msra.mxu0 %v1382
      %1392 = vmatpush.bf16.msra.mxu0 %v1381
      %1393 = vmatpush.bf16.msra.mxu0 %v1380
      %1394 = vmatpush.bf16.msra.mxu0 %v1379
      %1395 = vmatpush.bf16.msra.mxu0 %v1378
      %1396 = vmatpush.bf16.msra.mxu0 %v1377
      %1397 = vmatpush.bf16.msra.mxu0 %v1376
      %1398 = vmatmul.bf16.gmra.mxu0 %v1388
      %v1399 = vpop.f32.mrf.mxu0
      %v1400 = vadd.f32 0.0, %v1399
      %v1401 = vpop.f32.mrf.mxu0
      %v1402 = vadd.f32 0.0, %v1401
      %1403 = vdwg.mxu0
      %v1404 = vpack.c.bf16 %v1402, %v1400
      %v1405 = vld [vmem:[%s7] sm:$0xf]
      %v1406 = vld [vmem:[%s7 + $0x4] sm:$0xf]
      %v1407 = vld [vmem:[%s7 + $0x8] sm:$0xf]
      %v1408 = vld [vmem:[%s7 + $0xc] sm:$0xf]
      %v1409 = vld [vmem:[%s7 + $0x10] sm:$0xf]
      %v1410 = vld [vmem:[%s7 + $0x14] sm:$0xf]
      %v1411 = vld [vmem:[%s7 + $0x18] sm:$0xf]
      %v1412 = vld [vmem:[%s7 + $0x1c] sm:$0xf]
      %v1413 = vld [vmem:[%s7 + $0x20] sm:$0xf]
      %v1414 = vld [vmem:[%s7 + $0x24] sm:$0xf]
      %v1415 = vld [vmem:[%s7 + $0x28] sm:$0xf]
      %v1416 = vld [vmem:[%s7 + $0x2c] sm:$0xf]
      %v1417 = vld [vmem:[%s7 + $0x30] sm:$0xf]
      %v1418 = vld [vmem:[%s7 + $0x34] sm:$0xf]
      %v1419 = vld [vmem:[%s7 + $0x38] sm:$0xf]
      %v1420 = vld [vmem:[%s7 + $0x3c] sm:$0xf]
      %v1421 = vld [vmem:[%s8] sm:$0x1]
      %v1423 = vperm.slane %v1421, 0
      %v1441 = vunpack.c.l.b16 %v1405
      %v1442 = vunpack.c.l.b16 %v1406
      %v1443 = vunpack.c.l.b16 %v1407
      %v1444 = vunpack.c.l.b16 %v1408
      %v1445 = vunpack.c.l.b16 %v1409
      %v1446 = vunpack.c.l.b16 %v1410
      %v1447 = vunpack.c.l.b16 %v1411
      %v1448 = vunpack.c.l.b16 %v1412
      %v1449 = vunpack.c.l.b16 %v1413
      %v1450 = vunpack.c.l.b16 %v1414
      %v1451 = vunpack.c.l.b16 %v1415
      %v1452 = vunpack.c.l.b16 %v1416
      %v1453 = vunpack.c.l.b16 %v1417
      %v1454 = vunpack.c.l.b16 %v1418
      %v1455 = vunpack.c.l.b16 %v1419
      %v1456 = vunpack.c.l.b16 %v1420
      %v1457 = vpack.c.b16 %v1442, %v1441
      %v1458 = vpack.c.b16 %v1444, %v1443
      %v1459 = vpack.c.b16 %v1446, %v1445
      %v1460 = vpack.c.b16 %v1448, %v1447
      %v1461 = vpack.c.b16 %v1450, %v1449
      %v1462 = vpack.c.b16 %v1452, %v1451
      %v1463 = vpack.c.b16 %v1454, %v1453
      %v1464 = vpack.c.b16 %v1456, %v1455
      %1473 = vmatpush.bf16.msra.mxu0 %v1464
      %1474 = vmatpush.bf16.msra.mxu0 %v1463
      %1475 = vmatpush.bf16.msra.mxu0 %v1462
      %1476 = vmatpush.bf16.msra.mxu0 %v1461
      %1477 = vmatpush.bf16.msra.mxu0 %v1460
      %1478 = vmatpush.bf16.msra.mxu0 %v1459
      %1479 = vmatpush.bf16.msra.mxu0 %v1458
      %1480 = vmatpush.bf16.msra.mxu0 %v1457
      %1481 = vmatmul.bf16.gmra.mxu0 %v1404
      %v1482 = vpop.f32.mrf.mxu0
      %v1483 = vadd.f32 %v1423, %v1482
      %v1484 = vpop.f32.mrf.mxu0
      %v1485 = vadd.f32 %v1423, %v1484
      %1486 = vdwg.mxu0
      %1487 = vst [vmem:[%s372] sm:$0xff] %v1483
      %1488 = vst [vmem:[%s372 + $0x8] sm:$0xff] %v1485
      %p1489 = scmp.lt.s32.totalorder %s20, 3
      %s1490 = scalar_select %p1489, %s20, 3
      %s1491 = smul.addr %s1490, 2
      %s1492 = smul.addr %s1491, 8
      %s1493 = scalar_lea.vmem %s9, %s1492
      // Predicated region
      $region57: #{gcn_forward_batched.1} parent=55 // pred_check
        %p1494 = pneg %p242
      $region58: #{gcn_forward_batched.1} parent=55 // pred_check_branch
        %1496 = sbr.rel (%p1494) target = $region60
      $region59: #{gcn_forward_batched.1} parent=55 // pred_region
        _
      $region60: #{gcn_forward_batched.1} parent=55 // pred_fallthru
        _
    $region56: #{gcn_forward_batched.1} parent=5 // pred_fallthru
      _
    %p1497 = scmp.le.s32.totalorder 2, %s15
    // Predicated region
    $region61: #{gcn_forward_batched.1} parent=5 // pred_check
      %p1498 = pneg %p1497
    $region62: #{gcn_forward_batched.1} parent=5 // pred_check_branch
      %1500 = sbr.rel (%p1498) target = $region64
    $region63: #{gcn_forward_batched.1} parent=5 // pred_region
      %s1501 = ssub.s32 %s15, 2
      // Predicated region
      $region65: #{gcn_forward_batched.1} parent=63 // pred_check
        %p1502 = pneg %p248
      $region66: #{gcn_forward_batched.1} parent=63 // pred_check_branch
        %1504 = sbr.rel (%p1502) target = $region68
      $region67: #{gcn_forward_batched.1} parent=63 // pred_region
        %p1505 = scmp.lt.s32.totalorder %s21, 3
        %s1506 = scalar_select %p1505, %s21, 3
        %s1507 = smul.addr %s1506, 2
        %s1508 = smul.addr %s1507, 8
        %s1509 = scalar_lea.vmem %s9, %s1508
      $region68: #{gcn_forward_batched.1} parent=63 // pred_fallthru
        _
    $region64: #{gcn_forward_batched.1} parent=5 // pred_fallthru
      _
  $region6: #{gcn_forward_batched.1} parent=0 // loop_footer
    %s19 = sadd.s32 1, %s15
  $region7: #{gcn_forward_batched.1} parent=0 // loop_footer_branch
    %14 = sbr.rel target = $region3
  $region8: #{gcn_forward_batched.1} parent=0 // loop_exit
    _

</llo_original>
